<compile_context>
chip_gen: v6e
topology: v6e:2x2x1
jax: 0.10.0
libtpu: 0.0.40
codegen_flags: <defaults>
</compile_context>

<pallas_src>
import jax
import jax.numpy as jnp
from jax.experimental import pallas as pl
from jax.experimental.pallas import tpu as pltpu


def dqn_lstm_kernel(x_ref, wih_ref, whh_ref, b_ref, wfc_ref, bfc_ref,
                    out_ref, gx_scratch, hs_scratch):
    """Sequential LSTM over time + deferred (lane-padded) output projection.

    x_ref   : (T, D)      f32   input sequence
    wih_ref : (D, 4H)     f32   input->gates weight (transposed, order i,f,o,g)
    whh_ref : (H, 4H)     bf16  hidden->gates weight (transposed, order i,f,o,g)
    b_ref   : (1, 4H)     f32   combined bias b_ih + b_hh (order i,f,o,g)
    wfc_ref : (H, O_pad)  f32   fc weight (transposed, zero-padded to 128 lanes)
    bfc_ref : (1, O_pad)  f32   fc bias (zero-padded)
    out_ref : (T, O_pad)  f32   output (padded; sliced outside)
    gx_scratch : (T, 4H)  f32   hoisted x @ Wih + b
    hs_scratch : (T, H)   f32   per-step hidden states
    """
    T = x_ref.shape[0]
    H = whh_ref.shape[0]

    # Hoisted, time-invariant input projection: one batched matmul.
    gx_scratch[...] = (
        jnp.dot(x_ref[...], wih_ref[...], preferred_element_type=jnp.float32)
        + b_ref[...])

    # Load Whh once so the recurrence RHS stays resident across all T steps
    # (no per-unrolled-step re-materialization of the 128 KB bf16 operand).
    whh = whh_ref[...]                                      # (H, 4H) bf16

    def step(t, carry):
        h, c = carry                                        # (1, H) f32, in vregs

        # Only this matmul + the activations remain on the serial chain
        # (bf16 operands, f32 accumulate).
        gates = (gx_scratch[pl.ds(t, 1), :]
                 + jnp.dot(h.astype(jnp.bfloat16), whh,
                           preferred_element_type=jnp.float32))   # (1, 4H)

        # Gate order was permuted wrapper-side to [i, f, o, g]:
        # one activation over the first 3H lanes, one tanh over the last H.
        # sigmoid(x) == 0.5*(1 + tanh(0.5*x))  -> single EUP push per vreg.
        sig = 0.5 * (1.0 + jnp.tanh(0.5 * gates[:, 0:3 * H]))
        i = sig[:, 0:H]
        f = sig[:, H:2 * H]
        o = sig[:, 2 * H:3 * H]
        g = jnp.tanh(gates[:, 3 * H:4 * H])

        c_new = f * c + i * g
        h_new = o * jnp.tanh(c_new)

        # Off the serial chain: nothing inside the loop reads hs_scratch.
        hs_scratch[pl.ds(t, 1), :] = h_new
        return (h_new, c_new)

    h0 = jnp.zeros((1, H), jnp.float32)
    c0 = jnp.zeros((1, H), jnp.float32)
    # T is small and static -> fully unroll so the LLO scheduler can overlap
    # the MXU drain of step t with the EUP/VPU tail of step t-1.
    jax.lax.fori_loop(0, T, step, (h0, c0), unroll=True)

    # Deferred output projection: one (T,H)@(H,O_pad) matmul + bias, one
    # unmasked lane-dense store.
    out_ref[...] = (jnp.dot(hs_scratch[...], wfc_ref[...],
                            preferred_element_type=jnp.float32)
                    + bfc_ref[...]).astype(out_ref.dtype)


def dqn_lstm_forward(x, wih_t, whh_t, b, wfc_t, bfc):
    """Takes PyTorch-layout (pre-transposed) params with gate order i,f,g,o.

    x     : (T, D) f32
    wih_t : (D, 4H) f32   whh_t : (H, 4H) f32   b : (1, 4H) f32 (b_ih + b_hh)
    wfc_t : (H, O) f32    bfc : (1, O) f32
    """
    T, _ = x.shape
    H = whh_t.shape[0]
    O = wfc_t.shape[1]

    # Reorder gate columns i,f,g,o -> i,f,o,g (free layout plumbing; lets the
    # kernel do a single activation pass over [:, :3H]).
    def perm(w):
        return jnp.concatenate(
            [w[..., :2 * H], w[..., 3 * H:4 * H], w[..., 2 * H:3 * H]], axis=-1)

    wih_p = perm(wih_t)
    whh_p = perm(whh_t).astype(jnp.bfloat16)   # bf16 MXU operand in the loop
    b_p = perm(b)

    # Lane-dense FC output: zero-pad to a multiple of 128 lanes; slice outside.
    o_pad = max(128, ((O + 127) // 128) * 128)
    wfc_pad = jnp.zeros((H, o_pad), jnp.float32).at[:, :O].set(wfc_t)
    bfc_pad = jnp.zeros((1, o_pad), jnp.float32).at[:, :O].set(bfc)

    out_pad = pl.pallas_call(
        dqn_lstm_kernel,
        out_shape=jax.ShapeDtypeStruct((T, o_pad), jnp.float32),
        in_specs=[pl.BlockSpec(memory_space=pltpu.MemorySpace.VMEM)] * 6,
        out_specs=pl.BlockSpec(memory_space=pltpu.MemorySpace.VMEM),
        scratch_shapes=[
            pltpu.VMEM((T, 4 * H), jnp.float32),   # gx = x @ Wih + b
            pltpu.VMEM((T, H), jnp.float32),       # per-step hidden states
        ],
    )(x, wih_p, whh_p, b_p, wfc_pad, bfc_pad)

    return out_pad[:, :O]


def dqn_lstm_reference(x, wih_t, whh_t, b, wfc_t, bfc):
    """Pure-JAX f32 reference with PyTorch semantics (gate order i,f,g,o)."""
    H = whh_t.shape[0]

    def step(carry, x_t):
        h, c = carry
        gates = x_t @ wih_t + h @ whh_t + b[0]
        i = jax.nn.sigmoid(gates[0:H])
        f = jax.nn.sigmoid(gates[H:2 * H])
        g = jnp.tanh(gates[2 * H:3 * H])
        o = jax.nn.sigmoid(gates[3 * H:4 * H])
        c = f * c + i * g
        h = o * jnp.tanh(c)
        return (h, c), h

    (_, _), hs = jax.lax.scan(
        step, (jnp.zeros((H,), jnp.float32), jnp.zeros((H,), jnp.float32)), x)
    return hs @ wfc_t + bfc[0]


if __name__ == "__main__":
    # Small shapes consistent with the module's forward:
    # x: [seq=8, input_dim=16], state_size=128 (module default), output_dim=4
    T, D, H, O = 8, 16, 128, 4

    key = jax.random.PRNGKey(0)
    ks = jax.random.split(key, 8)
    scale = 1.0 / jnp.sqrt(H)   # PyTorch default init range U(-1/sqrt(H), 1/sqrt(H))

    # Parameters in PyTorch order (i,f,g,o), stored pre-transposed for
    # row @ (K,N) matmuls.
    wih_t = jax.random.uniform(ks[0], (D, 4 * H), jnp.float32, -scale, scale)
    whh_t = jax.random.uniform(ks[1], (H, 4 * H), jnp.float32, -scale, scale)
    b_ih = jax.random.uniform(ks[2], (4 * H,), jnp.float32, -scale, scale)
    b_hh = jax.random.uniform(ks[3], (4 * H,), jnp.float32, -scale, scale)
    b = (b_ih + b_hh).reshape(1, 4 * H)
    wfc_t = jax.random.uniform(ks[4], (H, O), jnp.float32, -scale, scale)
    bfc = jax.random.uniform(ks[5], (1, O), jnp.float32, -scale, scale)

    x = jax.random.normal(ks[6], (T, D), jnp.float32)

    out = dqn_lstm_forward(x, wih_t, whh_t, b, wfc_t, bfc)
    out = jax.block_until_ready(out)

    ref = dqn_lstm_reference(x, wih_t, whh_t, b, wfc_t, bfc)
    assert out.shape == (T, O)
    # Tolerance relaxed vs pure f32 because the in-loop h @ Whh uses bf16
    # operands (f32 accumulate) — expected precision change at T=8.
    assert jnp.allclose(out, ref, atol=5e-2, rtol=5e-2), "mismatch vs reference"

    print("KERNEL_OK")
</pallas_src>

<mosaic_0001>
module attributes {stable_mosaic.version = 11 : i64} {
  func.func @dqn_lstm_kernel(%arg0: memref<8x16xf32, #tpu.memory_space<vmem>>, %arg1: memref<16x512xf32, #tpu.memory_space<vmem>>, %arg2: memref<128x512xbf16, #tpu.memory_space<vmem>>, %arg3: memref<1x512xf32, #tpu.memory_space<vmem>>, %arg4: memref<128x128xf32, #tpu.memory_space<vmem>>, %arg5: memref<1x128xf32, #tpu.memory_space<vmem>>, %arg6: memref<8x128xf32, #tpu.memory_space<vmem>>, %arg7: memref<8x512xf32, #tpu.memory_space<vmem>>, %arg8: memref<8x128xf32, #tpu.memory_space<vmem>>) attributes {dimension_semantics = [], scalar_prefetch = 0 : i64, scratch_operands = 2 : i64, tpu.core_type = #tpu.core_type<tc>} {
    %c0 = arith.constant 0 : index
    %c0_0 = arith.constant 0 : index
    %0 = vector.load %arg0[%c0, %c0_0] : memref<8x16xf32, #tpu.memory_space<vmem>>, vector<8x16xf32>
    %c0_1 = arith.constant 0 : index
    %c0_2 = arith.constant 0 : index
    %1 = vector.load %arg1[%c0_1, %c0_2] : memref<16x512xf32, #tpu.memory_space<vmem>>, vector<16x512xf32>
    %cst = arith.constant dense<0.000000e+00> : vector<8x512xf32>
    %2 = tpu.matmul %0, %1, %cst {dimension_numbers = #tpu.dot_dimension_numbers<[1], [0], [0], [1], [0, 0, 1, 1], [], []>} : vector<8x16xf32>, vector<16x512xf32>, vector<8x512xf32> -> vector<8x512xf32>
    %c0_3 = arith.constant 0 : index
    %c0_4 = arith.constant 0 : index
    %3 = vector.load %arg3[%c0_3, %c0_4] : memref<1x512xf32, #tpu.memory_space<vmem>>, vector<1x512xf32>
    %4 = vector.broadcast %3 : vector<1x512xf32> to vector<8x512xf32>
    %5 = arith.addf %2, %4 : vector<8x512xf32>
    %c0_5 = arith.constant 0 : index
    %c0_6 = arith.constant 0 : index
    %6 = vector.load %arg7[%c0_5, %c0_6] : memref<8x512xf32, #tpu.memory_space<vmem>>, vector<8x512xf32>
    tpu.vector_store %arg7[%c0_5, %c0_6], %5 {strides = array<i32>} : memref<8x512xf32, #tpu.memory_space<vmem>>, vector<8x512xf32>,
    %c0_7 = arith.constant 0 : index
    %c0_8 = arith.constant 0 : index
    %7 = vector.load %arg2[%c0_7, %c0_8] : memref<128x512xbf16, #tpu.memory_space<vmem>>, vector<128x512xbf16>
    %cst_9 = arith.constant 0.000000e+00 : f32
    %8 = vector.broadcast %cst_9 : f32 to vector<1x128xf32>
    %cst_10 = arith.constant 0.000000e+00 : f32
    %9 = vector.broadcast %cst_10 : f32 to vector<1x128xf32>
    %c0_i32 = arith.constant 0 : i32
    %10 = arith.index_cast %c0_i32 : i32 to index
    %c0_11 = arith.constant 0 : index
    %11 = vector.load %arg7[%10, %c0_11] : memref<8x512xf32, #tpu.memory_space<vmem>>, vector<1x512xf32>
    %12 = arith.truncf %8 : vector<1x128xf32> to vector<1x128xbf16>
    %cst_12 = arith.constant dense<0.000000e+00> : vector<1x512xf32>
    %13 = tpu.matmul %12, %7, %cst_12 {dimension_numbers = #tpu.dot_dimension_numbers<[1], [0], [0], [1], [0, 0, 1, 1], [], []>} : vector<1x128xbf16>, vector<128x512xbf16>, vector<1x512xf32> -> vector<1x512xf32>
    %14 = arith.addf %11, %13 : vector<1x512xf32>
    %15 = vector.extract_strided_slice %14 {offsets = [0, 0], sizes = [1, 384], strides = [1, 1]} : vector<1x512xf32> to vector<1x384xf32>
    %cst_13 = arith.constant 5.000000e-01 : f32
    %16 = vector.broadcast %cst_13 : f32 to vector<1x384xf32>
    %17 = arith.mulf %16, %15 : vector<1x384xf32>
    %18 = math.tanh %17 : vector<1x384xf32>
    %cst_14 = arith.constant 1.000000e+00 : f32
    %19 = vector.broadcast %cst_14 : f32 to vector<1x384xf32>
    %20 = arith.addf %19, %18 : vector<1x384xf32>
    %cst_15 = arith.constant 5.000000e-01 : f32
    %21 = vector.broadcast %cst_15 : f32 to vector<1x384xf32>
    %22 = arith.mulf %21, %20 : vector<1x384xf32>
    %23 = vector.extract_strided_slice %22 {offsets = [0, 0], sizes = [1, 128], strides = [1, 1]} : vector<1x384xf32> to vector<1x128xf32>
    %24 = vector.extract_strided_slice %22 {offsets = [0, 128], sizes = [1, 128], strides = [1, 1]} : vector<1x384xf32> to vector<1x128xf32>
    %25 = vector.extract_strided_slice %22 {offsets = [0, 256], sizes = [1, 128], strides = [1, 1]} : vector<1x384xf32> to vector<1x128xf32>
    %26 = vector.extract_strided_slice %14 {offsets = [0, 384], sizes = [1, 128], strides = [1, 1]} : vector<1x512xf32> to vector<1x128xf32>
    %27 = math.tanh %26 : vector<1x128xf32>
    %28 = arith.mulf %24, %9 : vector<1x128xf32>
    %29 = arith.mulf %23, %27 : vector<1x128xf32>
    %30 = arith.addf %28, %29 : vector<1x128xf32>
    %31 = math.tanh %30 : vector<1x128xf32>
    %32 = arith.mulf %25, %31 : vector<1x128xf32>
    %33 = arith.index_cast %c0_i32 : i32 to index
    %c0_16 = arith.constant 0 : index
    %34 = vector.load %arg8[%33, %c0_16] : memref<8x128xf32, #tpu.memory_space<vmem>>, vector<1x128xf32>
    tpu.vector_store %arg8[%33, %c0_16], %32 {strides = array<i32>} : memref<8x128xf32, #tpu.memory_space<vmem>>, vector<1x128xf32>,
    %c1_i32 = arith.constant 1 : i32
    %35 = arith.index_cast %c1_i32 : i32 to index
    %c0_17 = arith.constant 0 : index
    %36 = vector.load %arg7[%35, %c0_17] : memref<8x512xf32, #tpu.memory_space<vmem>>, vector<1x512xf32>
    %37 = arith.truncf %32 : vector<1x128xf32> to vector<1x128xbf16>
    %cst_18 = arith.constant dense<0.000000e+00> : vector<1x512xf32>
    %38 = tpu.matmul %37, %7, %cst_18 {dimension_numbers = #tpu.dot_dimension_numbers<[1], [0], [0], [1], [0, 0, 1, 1], [], []>} : vector<1x128xbf16>, vector<128x512xbf16>, vector<1x512xf32> -> vector<1x512xf32>
    %39 = arith.addf %36, %38 : vector<1x512xf32>
    %40 = vector.extract_strided_slice %39 {offsets = [0, 0], sizes = [1, 384], strides = [1, 1]} : vector<1x512xf32> to vector<1x384xf32>
    %cst_19 = arith.constant 5.000000e-01 : f32
    %41 = vector.broadcast %cst_19 : f32 to vector<1x384xf32>
    %42 = arith.mulf %41, %40 : vector<1x384xf32>
    %43 = math.tanh %42 : vector<1x384xf32>
    %cst_20 = arith.constant 1.000000e+00 : f32
    %44 = vector.broadcast %cst_20 : f32 to vector<1x384xf32>
    %45 = arith.addf %44, %43 : vector<1x384xf32>
    %cst_21 = arith.constant 5.000000e-01 : f32
    %46 = vector.broadcast %cst_21 : f32 to vector<1x384xf32>
    %47 = arith.mulf %46, %45 : vector<1x384xf32>
    %48 = vector.extract_strided_slice %47 {offsets = [0, 0], sizes = [1, 128], strides = [1, 1]} : vector<1x384xf32> to vector<1x128xf32>
    %49 = vector.extract_strided_slice %47 {offsets = [0, 128], sizes = [1, 128], strides = [1, 1]} : vector<1x384xf32> to vector<1x128xf32>
    %50 = vector.extract_strided_slice %47 {offsets = [0, 256], sizes = [1, 128], strides = [1, 1]} : vector<1x384xf32> to vector<1x128xf32>
    %51 = vector.extract_strided_slice %39 {offsets = [0, 384], sizes = [1, 128], strides = [1, 1]} : vector<1x512xf32> to vector<1x128xf32>
    %52 = math.tanh %51 : vector<1x128xf32>
    %53 = arith.mulf %49, %30 : vector<1x128xf32>
    %54 = arith.mulf %48, %52 : vector<1x128xf32>
    %55 = arith.addf %53, %54 : vector<1x128xf32>
    %56 = math.tanh %55 : vector<1x128xf32>
    %57 = arith.mulf %50, %56 : vector<1x128xf32>
    %58 = arith.index_cast %c1_i32 : i32 to index
    %c0_22 = arith.constant 0 : index
    %59 = vector.load %arg8[%58, %c0_22] : memref<8x128xf32, #tpu.memory_space<vmem>>, vector<1x128xf32>
    tpu.vector_store %arg8[%58, %c0_22], %57 {strides = array<i32>} : memref<8x128xf32, #tpu.memory_space<vmem>>, vector<1x128xf32>,
    %c2_i32 = arith.constant 2 : i32
    %60 = arith.index_cast %c2_i32 : i32 to index
    %c0_23 = arith.constant 0 : index
    %61 = vector.load %arg7[%60, %c0_23] : memref<8x512xf32, #tpu.memory_space<vmem>>, vector<1x512xf32>
    %62 = arith.truncf %57 : vector<1x128xf32> to vector<1x128xbf16>
    %cst_24 = arith.constant dense<0.000000e+00> : vector<1x512xf32>
    %63 = tpu.matmul %62, %7, %cst_24 {dimension_numbers = #tpu.dot_dimension_numbers<[1], [0], [0], [1], [0, 0, 1, 1], [], []>} : vector<1x128xbf16>, vector<128x512xbf16>, vector<1x512xf32> -> vector<1x512xf32>
    %64 = arith.addf %61, %63 : vector<1x512xf32>
    %65 = vector.extract_strided_slice %64 {offsets = [0, 0], sizes = [1, 384], strides = [1, 1]} : vector<1x512xf32> to vector<1x384xf32>
    %cst_25 = arith.constant 5.000000e-01 : f32
    %66 = vector.broadcast %cst_25 : f32 to vector<1x384xf32>
    %67 = arith.mulf %66, %65 : vector<1x384xf32>
    %68 = math.tanh %67 : vector<1x384xf32>
    %cst_26 = arith.constant 1.000000e+00 : f32
    %69 = vector.broadcast %cst_26 : f32 to vector<1x384xf32>
    %70 = arith.addf %69, %68 : vector<1x384xf32>
    %cst_27 = arith.constant 5.000000e-01 : f32
    %71 = vector.broadcast %cst_27 : f32 to vector<1x384xf32>
    %72 = arith.mulf %71, %70 : vector<1x384xf32>
    %73 = vector.extract_strided_slice %72 {offsets = [0, 0], sizes = [1, 128], strides = [1, 1]} : vector<1x384xf32> to vector<1x128xf32>
    %74 = vector.extract_strided_slice %72 {offsets = [0, 128], sizes = [1, 128], strides = [1, 1]} : vector<1x384xf32> to vector<1x128xf32>
    %75 = vector.extract_strided_slice %72 {offsets = [0, 256], sizes = [1, 128], strides = [1, 1]} : vector<1x384xf32> to vector<1x128xf32>
    %76 = vector.extract_strided_slice %64 {offsets = [0, 384], sizes = [1, 128], strides = [1, 1]} : vector<1x512xf32> to vector<1x128xf32>
    %77 = math.tanh %76 : vector<1x128xf32>
    %78 = arith.mulf %74, %55 : vector<1x128xf32>
    %79 = arith.mulf %73, %77 : vector<1x128xf32>
    %80 = arith.addf %78, %79 : vector<1x128xf32>
    %81 = math.tanh %80 : vector<1x128xf32>
    %82 = arith.mulf %75, %81 : vector<1x128xf32>
    %83 = arith.index_cast %c2_i32 : i32 to index
    %c0_28 = arith.constant 0 : index
    %84 = vector.load %arg8[%83, %c0_28] : memref<8x128xf32, #tpu.memory_space<vmem>>, vector<1x128xf32>
    tpu.vector_store %arg8[%83, %c0_28], %82 {strides = array<i32>} : memref<8x128xf32, #tpu.memory_space<vmem>>, vector<1x128xf32>,
    %c3_i32 = arith.constant 3 : i32
    %85 = arith.index_cast %c3_i32 : i32 to index
    %c0_29 = arith.constant 0 : index
    %86 = vector.load %arg7[%85, %c0_29] : memref<8x512xf32, #tpu.memory_space<vmem>>, vector<1x512xf32>
    %87 = arith.truncf %82 : vector<1x128xf32> to vector<1x128xbf16>
    %cst_30 = arith.constant dense<0.000000e+00> : vector<1x512xf32>
    %88 = tpu.matmul %87, %7, %cst_30 {dimension_numbers = #tpu.dot_dimension_numbers<[1], [0], [0], [1], [0, 0, 1, 1], [], []>} : vector<1x128xbf16>, vector<128x512xbf16>, vector<1x512xf32> -> vector<1x512xf32>
    %89 = arith.addf %86, %88 : vector<1x512xf32>
    %90 = vector.extract_strided_slice %89 {offsets = [0, 0], sizes = [1, 384], strides = [1, 1]} : vector<1x512xf32> to vector<1x384xf32>
    %cst_31 = arith.constant 5.000000e-01 : f32
    %91 = vector.broadcast %cst_31 : f32 to vector<1x384xf32>
    %92 = arith.mulf %91, %90 : vector<1x384xf32>
    %93 = math.tanh %92 : vector<1x384xf32>
    %cst_32 = arith.constant 1.000000e+00 : f32
    %94 = vector.broadcast %cst_32 : f32 to vector<1x384xf32>
    %95 = arith.addf %94, %93 : vector<1x384xf32>
    %cst_33 = arith.constant 5.000000e-01 : f32
    %96 = vector.broadcast %cst_33 : f32 to vector<1x384xf32>
    %97 = arith.mulf %96, %95 : vector<1x384xf32>
    %98 = vector.extract_strided_slice %97 {offsets = [0, 0], sizes = [1, 128], strides = [1, 1]} : vector<1x384xf32> to vector<1x128xf32>
    %99 = vector.extract_strided_slice %97 {offsets = [0, 128], sizes = [1, 128], strides = [1, 1]} : vector<1x384xf32> to vector<1x128xf32>
    %100 = vector.extract_strided_slice %97 {offsets = [0, 256], sizes = [1, 128], strides = [1, 1]} : vector<1x384xf32> to vector<1x128xf32>
    %101 = vector.extract_strided_slice %89 {offsets = [0, 384], sizes = [1, 128], strides = [1, 1]} : vector<1x512xf32> to vector<1x128xf32>
    %102 = math.tanh %101 : vector<1x128xf32>
    %103 = arith.mulf %99, %80 : vector<1x128xf32>
    %104 = arith.mulf %98, %102 : vector<1x128xf32>
    %105 = arith.addf %103, %104 : vector<1x128xf32>
    %106 = math.tanh %105 : vector<1x128xf32>
    %107 = arith.mulf %100, %106 : vector<1x128xf32>
    %108 = arith.index_cast %c3_i32 : i32 to index
    %c0_34 = arith.constant 0 : index
    %109 = vector.load %arg8[%108, %c0_34] : memref<8x128xf32, #tpu.memory_space<vmem>>, vector<1x128xf32>
    tpu.vector_store %arg8[%108, %c0_34], %107 {strides = array<i32>} : memref<8x128xf32, #tpu.memory_space<vmem>>, vector<1x128xf32>,
    %c4_i32 = arith.constant 4 : i32
    %110 = arith.index_cast %c4_i32 : i32 to index
    %c0_35 = arith.constant 0 : index
    %111 = vector.load %arg7[%110, %c0_35] : memref<8x512xf32, #tpu.memory_space<vmem>>, vector<1x512xf32>
    %112 = arith.truncf %107 : vector<1x128xf32> to vector<1x128xbf16>
    %cst_36 = arith.constant dense<0.000000e+00> : vector<1x512xf32>
    %113 = tpu.matmul %112, %7, %cst_36 {dimension_numbers = #tpu.dot_dimension_numbers<[1], [0], [0], [1], [0, 0, 1, 1], [], []>} : vector<1x128xbf16>, vector<128x512xbf16>, vector<1x512xf32> -> vector<1x512xf32>
    %114 = arith.addf %111, %113 : vector<1x512xf32>
    %115 = vector.extract_strided_slice %114 {offsets = [0, 0], sizes = [1, 384], strides = [1, 1]} : vector<1x512xf32> to vector<1x384xf32>
    %cst_37 = arith.constant 5.000000e-01 : f32
    %116 = vector.broadcast %cst_37 : f32 to vector<1x384xf32>
    %117 = arith.mulf %116, %115 : vector<1x384xf32>
    %118 = math.tanh %117 : vector<1x384xf32>
    %cst_38 = arith.constant 1.000000e+00 : f32
    %119 = vector.broadcast %cst_38 : f32 to vector<1x384xf32>
    %120 = arith.addf %119, %118 : vector<1x384xf32>
    %cst_39 = arith.constant 5.000000e-01 : f32
    %121 = vector.broadcast %cst_39 : f32 to vector<1x384xf32>
    %122 = arith.mulf %121, %120 : vector<1x384xf32>
    %123 = vector.extract_strided_slice %122 {offsets = [0, 0], sizes = [1, 128], strides = [1, 1]} : vector<1x384xf32> to vector<1x128xf32>
    %124 = vector.extract_strided_slice %122 {offsets = [0, 128], sizes = [1, 128], strides = [1, 1]} : vector<1x384xf32> to vector<1x128xf32>
    %125 = vector.extract_strided_slice %122 {offsets = [0, 256], sizes = [1, 128], strides = [1, 1]} : vector<1x384xf32> to vector<1x128xf32>
    %126 = vector.extract_strided_slice %114 {offsets = [0, 384], sizes = [1, 128], strides = [1, 1]} : vector<1x512xf32> to vector<1x128xf32>
    %127 = math.tanh %126 : vector<1x128xf32>
    %128 = arith.mulf %124, %105 : vector<1x128xf32>
    %129 = arith.mulf %123, %127 : vector<1x128xf32>
    %130 = arith.addf %128, %129 : vector<1x128xf32>
    %131 = math.tanh %130 : vector<1x128xf32>
    %132 = arith.mulf %125, %131 : vector<1x128xf32>
    %133 = arith.index_cast %c4_i32 : i32 to index
    %c0_40 = arith.constant 0 : index
    %134 = vector.load %arg8[%133, %c0_40] : memref<8x128xf32, #tpu.memory_space<vmem>>, vector<1x128xf32>
    tpu.vector_store %arg8[%133, %c0_40], %132 {strides = array<i32>} : memref<8x128xf32, #tpu.memory_space<vmem>>, vector<1x128xf32>,
    %c5_i32 = arith.constant 5 : i32
    %135 = arith.index_cast %c5_i32 : i32 to index
    %c0_41 = arith.constant 0 : index
    %136 = vector.load %arg7[%135, %c0_41] : memref<8x512xf32, #tpu.memory_space<vmem>>, vector<1x512xf32>
    %137 = arith.truncf %132 : vector<1x128xf32> to vector<1x128xbf16>
    %cst_42 = arith.constant dense<0.000000e+00> : vector<1x512xf32>
    %138 = tpu.matmul %137, %7, %cst_42 {dimension_numbers = #tpu.dot_dimension_numbers<[1], [0], [0], [1], [0, 0, 1, 1], [], []>} : vector<1x128xbf16>, vector<128x512xbf16>, vector<1x512xf32> -> vector<1x512xf32>
    %139 = arith.addf %136, %138 : vector<1x512xf32>
    %140 = vector.extract_strided_slice %139 {offsets = [0, 0], sizes = [1, 384], strides = [1, 1]} : vector<1x512xf32> to vector<1x384xf32>
    %cst_43 = arith.constant 5.000000e-01 : f32
    %141 = vector.broadcast %cst_43 : f32 to vector<1x384xf32>
    %142 = arith.mulf %141, %140 : vector<1x384xf32>
    %143 = math.tanh %142 : vector<1x384xf32>
    %cst_44 = arith.constant 1.000000e+00 : f32
    %144 = vector.broadcast %cst_44 : f32 to vector<1x384xf32>
    %145 = arith.addf %144, %143 : vector<1x384xf32>
    %cst_45 = arith.constant 5.000000e-01 : f32
    %146 = vector.broadcast %cst_45 : f32 to vector<1x384xf32>
    %147 = arith.mulf %146, %145 : vector<1x384xf32>
    %148 = vector.extract_strided_slice %147 {offsets = [0, 0], sizes = [1, 128], strides = [1, 1]} : vector<1x384xf32> to vector<1x128xf32>
    %149 = vector.extract_strided_slice %147 {offsets = [0, 128], sizes = [1, 128], strides = [1, 1]} : vector<1x384xf32> to vector<1x128xf32>
    %150 = vector.extract_strided_slice %147 {offsets = [0, 256], sizes = [1, 128], strides = [1, 1]} : vector<1x384xf32> to vector<1x128xf32>
    %151 = vector.extract_strided_slice %139 {offsets = [0, 384], sizes = [1, 128], strides = [1, 1]} : vector<1x512xf32> to vector<1x128xf32>
    %152 = math.tanh %151 : vector<1x128xf32>
    %153 = arith.mulf %149, %130 : vector<1x128xf32>
    %154 = arith.mulf %148, %152 : vector<1x128xf32>
    %155 = arith.addf %153, %154 : vector<1x128xf32>
    %156 = math.tanh %155 : vector<1x128xf32>
    %157 = arith.mulf %150, %156 : vector<1x128xf32>
    %158 = arith.index_cast %c5_i32 : i32 to index
    %c0_46 = arith.constant 0 : index
    %159 = vector.load %arg8[%158, %c0_46] : memref<8x128xf32, #tpu.memory_space<vmem>>, vector<1x128xf32>
    tpu.vector_store %arg8[%158, %c0_46], %157 {strides = array<i32>} : memref<8x128xf32, #tpu.memory_space<vmem>>, vector<1x128xf32>,
    %c6_i32 = arith.constant 6 : i32
    %160 = arith.index_cast %c6_i32 : i32 to index
    %c0_47 = arith.constant 0 : index
    %161 = vector.load %arg7[%160, %c0_47] : memref<8x512xf32, #tpu.memory_space<vmem>>, vector<1x512xf32>
    %162 = arith.truncf %157 : vector<1x128xf32> to vector<1x128xbf16>
    %cst_48 = arith.constant dense<0.000000e+00> : vector<1x512xf32>
    %163 = tpu.matmul %162, %7, %cst_48 {dimension_numbers = #tpu.dot_dimension_numbers<[1], [0], [0], [1], [0, 0, 1, 1], [], []>} : vector<1x128xbf16>, vector<128x512xbf16>, vector<1x512xf32> -> vector<1x512xf32>
    %164 = arith.addf %161, %163 : vector<1x512xf32>
    %165 = vector.extract_strided_slice %164 {offsets = [0, 0], sizes = [1, 384], strides = [1, 1]} : vector<1x512xf32> to vector<1x384xf32>
    %cst_49 = arith.constant 5.000000e-01 : f32
    %166 = vector.broadcast %cst_49 : f32 to vector<1x384xf32>
    %167 = arith.mulf %166, %165 : vector<1x384xf32>
    %168 = math.tanh %167 : vector<1x384xf32>
    %cst_50 = arith.constant 1.000000e+00 : f32
    %169 = vector.broadcast %cst_50 : f32 to vector<1x384xf32>
    %170 = arith.addf %169, %168 : vector<1x384xf32>
    %cst_51 = arith.constant 5.000000e-01 : f32
    %171 = vector.broadcast %cst_51 : f32 to vector<1x384xf32>
    %172 = arith.mulf %171, %170 : vector<1x384xf32>
    %173 = vector.extract_strided_slice %172 {offsets = [0, 0], sizes = [1, 128], strides = [1, 1]} : vector<1x384xf32> to vector<1x128xf32>
    %174 = vector.extract_strided_slice %172 {offsets = [0, 128], sizes = [1, 128], strides = [1, 1]} : vector<1x384xf32> to vector<1x128xf32>
    %175 = vector.extract_strided_slice %172 {offsets = [0, 256], sizes = [1, 128], strides = [1, 1]} : vector<1x384xf32> to vector<1x128xf32>
    %176 = vector.extract_strided_slice %164 {offsets = [0, 384], sizes = [1, 128], strides = [1, 1]} : vector<1x512xf32> to vector<1x128xf32>
    %177 = math.tanh %176 : vector<1x128xf32>
    %178 = arith.mulf %174, %155 : vector<1x128xf32>
    %179 = arith.mulf %173, %177 : vector<1x128xf32>
    %180 = arith.addf %178, %179 : vector<1x128xf32>
    %181 = math.tanh %180 : vector<1x128xf32>
    %182 = arith.mulf %175, %181 : vector<1x128xf32>
    %183 = arith.index_cast %c6_i32 : i32 to index
    %c0_52 = arith.constant 0 : index
    %184 = vector.load %arg8[%183, %c0_52] : memref<8x128xf32, #tpu.memory_space<vmem>>, vector<1x128xf32>
    tpu.vector_store %arg8[%183, %c0_52], %182 {strides = array<i32>} : memref<8x128xf32, #tpu.memory_space<vmem>>, vector<1x128xf32>,
    %c7_i32 = arith.constant 7 : i32
    %185 = arith.index_cast %c7_i32 : i32 to index
    %c0_53 = arith.constant 0 : index
    %186 = vector.load %arg7[%185, %c0_53] : memref<8x512xf32, #tpu.memory_space<vmem>>, vector<1x512xf32>
    %187 = arith.truncf %182 : vector<1x128xf32> to vector<1x128xbf16>
    %cst_54 = arith.constant dense<0.000000e+00> : vector<1x512xf32>
    %188 = tpu.matmul %187, %7, %cst_54 {dimension_numbers = #tpu.dot_dimension_numbers<[1], [0], [0], [1], [0, 0, 1, 1], [], []>} : vector<1x128xbf16>, vector<128x512xbf16>, vector<1x512xf32> -> vector<1x512xf32>
    %189 = arith.addf %186, %188 : vector<1x512xf32>
    %190 = vector.extract_strided_slice %189 {offsets = [0, 0], sizes = [1, 384], strides = [1, 1]} : vector<1x512xf32> to vector<1x384xf32>
    %cst_55 = arith.constant 5.000000e-01 : f32
    %191 = vector.broadcast %cst_55 : f32 to vector<1x384xf32>
    %192 = arith.mulf %191, %190 : vector<1x384xf32>
    %193 = math.tanh %192 : vector<1x384xf32>
    %cst_56 = arith.constant 1.000000e+00 : f32
    %194 = vector.broadcast %cst_56 : f32 to vector<1x384xf32>
    %195 = arith.addf %194, %193 : vector<1x384xf32>
    %cst_57 = arith.constant 5.000000e-01 : f32
    %196 = vector.broadcast %cst_57 : f32 to vector<1x384xf32>
    %197 = arith.mulf %196, %195 : vector<1x384xf32>
    %198 = vector.extract_strided_slice %197 {offsets = [0, 0], sizes = [1, 128], strides = [1, 1]} : vector<1x384xf32> to vector<1x128xf32>
    %199 = vector.extract_strided_slice %197 {offsets = [0, 128], sizes = [1, 128], strides = [1, 1]} : vector<1x384xf32> to vector<1x128xf32>
    %200 = vector.extract_strided_slice %197 {offsets = [0, 256], sizes = [1, 128], strides = [1, 1]} : vector<1x384xf32> to vector<1x128xf32>
    %201 = vector.extract_strided_slice %189 {offsets = [0, 384], sizes = [1, 128], strides = [1, 1]} : vector<1x512xf32> to vector<1x128xf32>
    %202 = math.tanh %201 : vector<1x128xf32>
    %203 = arith.mulf %199, %180 : vector<1x128xf32>
    %204 = arith.mulf %198, %202 : vector<1x128xf32>
    %205 = arith.addf %203, %204 : vector<1x128xf32>
    %206 = math.tanh %205 : vector<1x128xf32>
    %207 = arith.mulf %200, %206 : vector<1x128xf32>
    %208 = arith.index_cast %c7_i32 : i32 to index
    %c0_58 = arith.constant 0 : index
    %209 = vector.load %arg8[%208, %c0_58] : memref<8x128xf32, #tpu.memory_space<vmem>>, vector<1x128xf32>
    tpu.vector_store %arg8[%208, %c0_58], %207 {strides = array<i32>} : memref<8x128xf32, #tpu.memory_space<vmem>>, vector<1x128xf32>,
    %c8_i32 = arith.constant 8 : i32
    %c0_59 = arith.constant 0 : index
    %c0_60 = arith.constant 0 : index
    %210 = vector.load %arg8[%c0_59, %c0_60] : memref<8x128xf32, #tpu.memory_space<vmem>>, vector<8x128xf32>
    %c0_61 = arith.constant 0 : index
    %c0_62 = arith.constant 0 : index
    %211 = vector.load %arg4[%c0_61, %c0_62] : memref<128x128xf32, #tpu.memory_space<vmem>>, vector<128x128xf32>
    %cst_63 = arith.constant dense<0.000000e+00> : vector<8x128xf32>
    %212 = tpu.matmul %210, %211, %cst_63 {dimension_numbers = #tpu.dot_dimension_numbers<[1], [0], [0], [1], [0, 0, 1, 1], [], []>} : vector<8x128xf32>, vector<128x128xf32>, vector<8x128xf32> -> vector<8x128xf32>
    %c0_64 = arith.constant 0 : index
    %c0_65 = arith.constant 0 : index
    %213 = vector.load %arg5[%c0_64, %c0_65] : memref<1x128xf32, #tpu.memory_space<vmem>>, vector<1x128xf32>
    %214 = vector.broadcast %213 : vector<1x128xf32> to vector<8x128xf32>
    %215 = arith.addf %212, %214 : vector<8x128xf32>
    %c0_66 = arith.constant 0 : index
    %c0_67 = arith.constant 0 : index
    %216 = vector.load %arg6[%c0_66, %c0_67] : memref<8x128xf32, #tpu.memory_space<vmem>>, vector<8x128xf32>
    tpu.vector_store %arg6[%c0_66, %c0_67], %215 {strides = array<i32>} : memref<8x128xf32, #tpu.memory_space<vmem>>, vector<8x128xf32>,
    return
  }
}

</mosaic_0001>

<llo_original>
// kernel: tpu_custom_call.1
$region0: #{tpu_custom_call.1}
  #allocation0 [shape = 'u32[]', space=smem, size = 0x4, offset = 0x4, fixed_abs, tag = 'smem constant byte address 0x4 - core index']
  #allocation1 [shape = 'u32[144,128]{1,0:T(1,128)}', space=vmem, size = 0x12000, scoped, tag = 'internal scratch']
  #allocation2 [shape = 'f32[8,512]{1,0:T(8,128)}', space=vmem, size = 0x4000, scoped, tag = 'scratch operand']
  #allocation3 [shape = 'f32[8,128]{1,0:T(8,128)}', space=vmem, size = 0x1000, scoped, tag = 'scratch operand']
  %s0 = inlined_call_operand.hbm [shape: f32[8,16], index: 0, kind: input, shape index: {}]
  %s1 = inlined_call_operand.hbm [shape: f32[16,512], index: 1, kind: input, shape index: {}]
  %s2 = inlined_call_operand.hbm [shape: bf16[128,512], index: 2, kind: input, shape index: {}]
  %s3 = inlined_call_operand.vmem [shape: f32[1,512], index: 3, kind: input, shape index: {}]
  %s4 = inlined_call_operand.hbm [shape: f32[128,128], index: 4, kind: input, shape index: {}]
  %s5 = inlined_call_operand.vmem [shape: f32[1,128], index: 5, kind: input, shape index: {}]
  %s6 = inlined_call_operand.hbm [shape: f32[8,128], index: 6, kind: output, shape index: {}]
  %s7 = sld [smem:[#allocation0]]
  $region50: #{tpu_custom_call.1} parent=0
    _
  %s9 = ssub.s32 1, %s7
  %s10 = scalar_select 0, %s9, %s7
  $region1: #{tpu_custom_call.1} parent=0
    #allocation4 [shape = 'u8[4096]{0}', space=vmem, size = 0x1000, scoped, tag = 'input window, operand 0, single buffered']
    #allocation5 [shape = 's32[1]{0}', space=sflag, size = 0x4, scoped, tag = 'scoped memory for tpu_custom_call.1']
    #allocation6 [shape = 's32[1]{0}', space=sflag, size = 0x4, scoped, tag = 'scoped memory for tpu_custom_call.1']
    #allocation7 [shape = 'u8[32768]{0}', space=vmem, size = 0x8000, scoped, tag = 'input window, operand 1, single buffered']
    #allocation8 [shape = 's32[1]{0}', space=sflag, size = 0x4, scoped, tag = 'scoped memory for tpu_custom_call.1']
    #allocation9 [shape = 'u8[131072]{0}', space=vmem, size = 0x20000, scoped, tag = 'input window, operand 2, single buffered']
    #allocation10 [shape = 'u8[65536]{0}', space=vmem, size = 0x10000, scoped, tag = 'input window, operand 4, single buffered']
    #allocation11 [shape = 's32[1]{0}', space=sflag, size = 0x4, scoped, tag = 'scoped memory for tpu_custom_call.1']
    #allocation12 [shape = 'u8[4096]{0}', space=vmem, size = 0x1000, scoped, tag = 'output window, operand 0, single buffered']
    %11 = vsyncpa [#allocation5], 0
    %12 = vsyncpa [#allocation8], 0
    %13 = vsyncpa [#allocation11], 0
    %14 = vsyncpa [#allocation6], 0
    // Predicated region
    $region2: #{tpu_custom_call.1} parent=1 // pred_check
      _
    $region3: #{tpu_custom_call.1} parent=1 // pred_check_branch
      %16 = sbr.rel (0) target = $region5
    $region4: #{tpu_custom_call.1} parent=1 // pred_region
      %s18 = ssub.s32 128, 128
      %19 = vsyncadd [#allocation5], %s18
      %s21 = sshll.u32 [#allocation4], 4
      %s22 = int_to_ptr.vmem [resolvable:$true] %s21
      %24 = dma.hbm_to_vmem [thread:$0]  %s0, 128, %s22, [#allocation5]
    $region5: #{tpu_custom_call.1} parent=1 // pred_fallthru
      _
    // Predicated region
    $region6: #{tpu_custom_call.1} parent=1 // pred_check
      _
    $region7: #{tpu_custom_call.1} parent=1 // pred_check_branch
      %26 = sbr.rel (0) target = $region9
    $region8: #{tpu_custom_call.1} parent=1 // pred_region
      %s28 = ssub.s32 1024, 1024
      %29 = vsyncadd [#allocation8], %s28
      %s30 = sshll.u32 [#allocation7], 4
      %s31 = int_to_ptr.vmem [resolvable:$true] %s30
      %36 = dma.hbm_to_vmem [thread:$0]  %s1, 1024, %s31, [#allocation8], 512, 512, 32
    $region9: #{tpu_custom_call.1} parent=1 // pred_fallthru
      _
    // Predicated region
    $region10: #{tpu_custom_call.1} parent=1 // pred_check
      _
    $region11: #{tpu_custom_call.1} parent=1 // pred_check_branch
      %38 = sbr.rel (0) target = $region13
    $region12: #{tpu_custom_call.1} parent=1 // pred_region
      %s40 = ssub.s32 4096, 4096
      %41 = vsyncadd [#allocation8], %s40
      %s42 = sshll.u32 [#allocation9], 4
      %s43 = int_to_ptr.vmem [resolvable:$true] %s42
      %48 = dma.hbm_to_vmem [thread:$0]  %s2, 4096, %s43, [#allocation8], 256, 256, 16
    $region13: #{tpu_custom_call.1} parent=1 // pred_fallthru
      _
    // Predicated region
    $region14: #{tpu_custom_call.1} parent=1 // pred_check
      _
    $region15: #{tpu_custom_call.1} parent=1 // pred_check_branch
      %50 = sbr.rel (0) target = $region17
    $region16: #{tpu_custom_call.1} parent=1 // pred_region
      _
    $region17: #{tpu_custom_call.1} parent=1 // pred_fallthru
      _
    // Predicated region
    $region18: #{tpu_custom_call.1} parent=1 // pred_check
      _
    $region19: #{tpu_custom_call.1} parent=1 // pred_check_branch
      %52 = sbr.rel (0) target = $region21
    $region20: #{tpu_custom_call.1} parent=1 // pred_region
      %s54 = ssub.s32 2048, 2048
      %55 = vsyncadd [#allocation11], %s54
      %s56 = sshll.u32 [#allocation10], 4
      %s57 = int_to_ptr.vmem [resolvable:$true] %s56
      %62 = dma.hbm_to_vmem [thread:$0]  %s4, 2048, %s57, [#allocation11], 128, 128, 8
    $region21: #{tpu_custom_call.1} parent=1 // pred_fallthru
      _
    // Predicated region
    $region22: #{tpu_custom_call.1} parent=1 // pred_check
      _
    $region23: #{tpu_custom_call.1} parent=1 // pred_check_branch
      %64 = sbr.rel (0) target = $region25
    $region24: #{tpu_custom_call.1} parent=1 // pred_region
      _
    $region25: #{tpu_custom_call.1} parent=1 // pred_fallthru
      _
    // Predicated region
    $region26: #{tpu_custom_call.1} parent=1 // pred_check
      _
    $region27: #{tpu_custom_call.1} parent=1 // pred_check_branch
      %66 = sbr.rel (0) target = $region29
    $region28: #{tpu_custom_call.1} parent=1 // pred_region
      %67 = dma.done [#allocation5], 128
    $region29: #{tpu_custom_call.1} parent=1 // pred_fallthru
      _
    // Predicated region
    $region30: #{tpu_custom_call.1} parent=1 // pred_check
      _
    $region31: #{tpu_custom_call.1} parent=1 // pred_check_branch
      %69 = sbr.rel (0) target = $region33
    $region32: #{tpu_custom_call.1} parent=1 // pred_region
      %70 = dma.done [#allocation8], 1024
    $region33: #{tpu_custom_call.1} parent=1 // pred_fallthru
      _
    // Predicated region
    $region34: #{tpu_custom_call.1} parent=1 // pred_check
      _
    $region35: #{tpu_custom_call.1} parent=1 // pred_check_branch
      %72 = sbr.rel (0) target = $region37
    $region36: #{tpu_custom_call.1} parent=1 // pred_region
      %73 = dma.done [#allocation8], 4096
    $region37: #{tpu_custom_call.1} parent=1 // pred_fallthru
      _
    // Predicated region
    $region38: #{tpu_custom_call.1} parent=1 // pred_check
      _
    $region39: #{tpu_custom_call.1} parent=1 // pred_check_branch
      %75 = sbr.rel (0) target = $region41
    $region40: #{tpu_custom_call.1} parent=1 // pred_region
      %76 = dma.done [#allocation11], 2048
    $region41: #{tpu_custom_call.1} parent=1 // pred_fallthru
      _
    %v78 = vld [vmem:[#allocation4] sm:$0xff]
    %v79 = vld [vmem:[#allocation7] sm:$0xff]
    %v80 = vld [vmem:[#allocation7 + $0x8] sm:$0xff]
    %v81 = vld [vmem:[#allocation7 + $0x10] sm:$0xff]
    %v82 = vld [vmem:[#allocation7 + $0x18] sm:$0xff]
    %v83 = vld [vmem:[#allocation7 + $0x20] sm:$0xff]
    %v84 = vld [vmem:[#allocation7 + $0x28] sm:$0xff]
    %v85 = vld [vmem:[#allocation7 + $0x30] sm:$0xff]
    %v86 = vld [vmem:[#allocation7 + $0x38] sm:$0xff]
    %v87 = vld [vmem:[%s3] sm:$0xf]
    %v89 = vlaneseq
    %v90 = vshrl.u32 %v89, 7
    %v91 = vsub.s32 0, %v90
    %v92 = vrot.slane %v87, %v91
    %v93 = vlaneseq
    %v94 = vshrl.u32 %v93, 7
    %v95 = vsub.s32 1, %v94
    %v96 = vrot.slane %v87, %v95
    %v97 = vlaneseq
    %v98 = vshrl.u32 %v97, 7
    %v99 = vsub.s32 2, %v98
    %v100 = vrot.slane %v87, %v99
    %v101 = vlaneseq
    %v102 = vshrl.u32 %v101, 7
    %v103 = vsub.s32 3, %v102
    %v104 = vrot.slane %v87, %v103
    %vm109 = vcmask 130048
    %v111 = vsel %vm109, %v78, 0
    %113 = vmatprep.subr.mxu0 0.0
    %114 = vmatpush1.msra.mxu0 0.0
    %115 = vmatprep.subr.mxu0 0.0
    %116 = vmatpush1.msra.mxu0 0.0
    %117 = vmatprep.subr.mxu0 0.0
    %118 = vmatpush1.msra.mxu0 0.0
    %119 = vmatprep.subr.mxu0 0.0
    %120 = vmatpush1.msra.mxu0 0.0
    %121 = vmatprep.subr.mxu0 0.0
    %122 = vmatpush1.msra.mxu0 0.0
    %123 = vmatprep.subr.mxu0 0.0
    %124 = vmatpush1.msra.mxu0 0.0
    %125 = vmatprep.subr.mxu0 0.0
    %126 = vmatpush1.msra.mxu0 0.0
    %127 = vmatprep.subr.mxu0 0.0
    %128 = vmatpush1.msra.mxu0 0.0
    %129 = vmatprep.subr.mxu0 0.0
    %130 = vmatpush1.msra.mxu0 0.0
    %131 = vmatprep.subr.mxu0 0.0
    %132 = vmatpush1.msra.mxu0 0.0
    %133 = vmatprep.subr.mxu0 0.0
    %134 = vmatpush1.msra.mxu0 0.0
    %135 = vmatprep.subr.mxu0 0.0
    %136 = vmatpush1.msra.mxu0 0.0
    %137 = vmatprep.subr.mxu0 0.0
    %138 = vmatpush1.msra.mxu0 0.0
    %139 = vmatprep.subr.mxu0 0.0
    %140 = vmatpush1.msra.mxu0 0.0
    %141 = vmatprep.subr.mxu0 %v84
    %142 = vmatpush1.msra.mxu0 %v83
    %143 = vmatprep.subr.mxu0 %v80
    %144 = vmatpush1.msra.mxu0 %v79
    %145 = vmatprep.subr.mxu0 0.0
    %146 = vmatpush2.msra.mxu0 0.0
    %147 = vmatprep.subr.mxu0 0.0
    %148 = vmatpush2.msra.mxu0 0.0
    %149 = vmatprep.subr.mxu0 0.0
    %150 = vmatpush2.msra.mxu0 0.0
    %151 = vmatprep.subr.mxu0 0.0
    %152 = vmatpush2.msra.mxu0 0.0
    %153 = vmatprep.subr.mxu0 0.0
    %154 = vmatpush2.msra.mxu0 0.0
    %155 = vmatprep.subr.mxu0 0.0
    %156 = vmatpush2.msra.mxu0 0.0
    %157 = vmatprep.subr.mxu0 0.0
    %158 = vmatpush2.msra.mxu0 0.0
    %159 = vmatprep.subr.mxu0 0.0
    %160 = vmatpush2.msra.mxu0 0.0
    %161 = vmatprep.subr.mxu0 0.0
    %162 = vmatpush2.msra.mxu0 0.0
    %163 = vmatprep.subr.mxu0 0.0
    %164 = vmatpush2.msra.mxu0 0.0
    %165 = vmatprep.subr.mxu0 0.0
    %166 = vmatpush2.msra.mxu0 0.0
    %167 = vmatprep.subr.mxu0 0.0
    %168 = vmatpush2.msra.mxu0 0.0
    %169 = vmatprep.subr.mxu0 0.0
    %170 = vmatpush2.msra.mxu0 0.0
    %171 = vmatprep.subr.mxu0 0.0
    %172 = vmatpush2.msra.mxu0 0.0
    %173 = vmatprep.subr.mxu0 0.0
    %174 = vmatpush2.msra.mxu0 0.0
    %175 = vmatprep.subr.mxu0 0.0
    %176 = vmatpush2.msra.mxu0 0.0
    %177 = vmatprep.mubr.f32.mxu0 0.0
    %178 = vmatmul.mubr.f32.gmra.mxu0 %v111
    %v179 = vpop.f32.mrf.mxu0
    %v180 = vadd.f32 %v92, %v179
    %v181 = vpop.f32.mrf.mxu0
    %v182 = vadd.f32 %v96, %v181
    %183 = vdwg.mxu0
    %184 = vmatprep.subr.mxu0 0.0
    %185 = vmatpush1.msra.mxu0 0.0
    %186 = vmatprep.subr.mxu0 0.0
    %187 = vmatpush1.msra.mxu0 0.0
    %188 = vmatprep.subr.mxu0 0.0
    %189 = vmatpush1.msra.mxu0 0.0
    %190 = vmatprep.subr.mxu0 0.0
    %191 = vmatpush1.msra.mxu0 0.0
    %192 = vmatprep.subr.mxu0 0.0
    %193 = vmatpush1.msra.mxu0 0.0
    %194 = vmatprep.subr.mxu0 0.0
    %195 = vmatpush1.msra.mxu0 0.0
    %196 = vmatprep.subr.mxu0 0.0
    %197 = vmatpush1.msra.mxu0 0.0
    %198 = vmatprep.subr.mxu0 0.0
    %199 = vmatpush1.msra.mxu0 0.0
    %200 = vmatprep.subr.mxu0 0.0
    %201 = vmatpush1.msra.mxu0 0.0
    %202 = vmatprep.subr.mxu0 0.0
    %203 = vmatpush1.msra.mxu0 0.0
    %204 = vmatprep.subr.mxu0 0.0
    %205 = vmatpush1.msra.mxu0 0.0
    %206 = vmatprep.subr.mxu0 0.0
    %207 = vmatpush1.msra.mxu0 0.0
    %208 = vmatprep.subr.mxu0 0.0
    %209 = vmatpush1.msra.mxu0 0.0
    %210 = vmatprep.subr.mxu0 0.0
    %211 = vmatpush1.msra.mxu0 0.0
    %212 = vmatprep.subr.mxu0 %v86
    %213 = vmatpush1.msra.mxu0 %v85
    %214 = vmatprep.subr.mxu0 %v82
    %215 = vmatpush1.msra.mxu0 %v81
    %216 = vmatprep.subr.mxu0 0.0
    %217 = vmatpush2.msra.mxu0 0.0
    %218 = vmatprep.subr.mxu0 0.0
    %219 = vmatpush2.msra.mxu0 0.0
    %220 = vmatprep.subr.mxu0 0.0
    %221 = vmatpush2.msra.mxu0 0.0
    %222 = vmatprep.subr.mxu0 0.0
    %223 = vmatpush2.msra.mxu0 0.0
    %224 = vmatprep.subr.mxu0 0.0
    %225 = vmatpush2.msra.mxu0 0.0
    %226 = vmatprep.subr.mxu0 0.0
    %227 = vmatpush2.msra.mxu0 0.0
    %228 = vmatprep.subr.mxu0 0.0
    %229 = vmatpush2.msra.mxu0 0.0
    %230 = vmatprep.subr.mxu0 0.0
    %231 = vmatpush2.msra.mxu0 0.0
    %232 = vmatprep.subr.mxu0 0.0
    %233 = vmatpush2.msra.mxu0 0.0
    %234 = vmatprep.subr.mxu0 0.0
    %235 = vmatpush2.msra.mxu0 0.0
    %236 = vmatprep.subr.mxu0 0.0
    %237 = vmatpush2.msra.mxu0 0.0
    %238 = vmatprep.subr.mxu0 0.0
    %239 = vmatpush2.msra.mxu0 0.0
    %240 = vmatprep.subr.mxu0 0.0
    %241 = vmatpush2.msra.mxu0 0.0
    %242 = vmatprep.subr.mxu0 0.0
    %243 = vmatpush2.msra.mxu0 0.0
    %244 = vmatprep.subr.mxu0 0.0
    %245 = vmatpush2.msra.mxu0 0.0
    %246 = vmatprep.subr.mxu0 0.0
    %247 = vmatpush2.msra.mxu0 0.0
    %248 = vmatprep.mubr.f32.mxu0 0.0
    %249 = vmatmul.mubr.f32.gmra.mxu0 %v111
    %v250 = vpop.f32.mrf.mxu0
    %v251 = vadd.f32 %v100, %v250
    %v252 = vpop.f32.mrf.mxu0
    %v253 = vadd.f32 %v104, %v252
    %254 = vdwg.mxu0
    %255 = vst [vmem:[#allocation2] sm:$0xff] %v180
    %256 = vst [vmem:[#allocation2 + $0x8] sm:$0xff] %v182
    %257 = vst [vmem:[#allocation2 + $0x10] sm:$0xff] %v251
    %258 = vst [vmem:[#allocation2 + $0x18] sm:$0xff] %v253
    %v259 = vld [vmem:[#allocation9] sm:$0xff]
    %v260 = vld [vmem:[#allocation9 + $0x8] sm:$0xff]
    %v261 = vld [vmem:[#allocation9 + $0x10] sm:$0xff]
    %v262 = vld [vmem:[#allocation9 + $0x18] sm:$0xff]
    %v263 = vld [vmem:[#allocation9 + $0x20] sm:$0xff]
    %v264 = vld [vmem:[#allocation9 + $0x28] sm:$0xff]
    %v265 = vld [vmem:[#allocation9 + $0x30] sm:$0xff]
    %v266 = vld [vmem:[#allocation9 + $0x38] sm:$0xff]
    %v267 = vld [vmem:[#allocation9 + $0x40] sm:$0xff]
    %v268 = vld [vmem:[#allocation9 + $0x48] sm:$0xff]
    %v269 = vld [vmem:[#allocation9 + $0x50] sm:$0xff]
    %v270 = vld [vmem:[#allocation9 + $0x58] sm:$0xff]
    %v271 = vld [vmem:[#allocation9 + $0x60] sm:$0xff]
    %v272 = vld [vmem:[#allocation9 + $0x68] sm:$0xff]
    %v273 = vld [vmem:[#allocation9 + $0x70] sm:$0xff]
    %v274 = vld [vmem:[#allocation9 + $0x78] sm:$0xff]
    %v275 = vld [vmem:[#allocation9 + $0x80] sm:$0xff]
    %v276 = vld [vmem:[#allocation9 + $0x88] sm:$0xff]
    %v277 = vld [vmem:[#allocation9 + $0x90] sm:$0xff]
    %v278 = vld [vmem:[#allocation9 + $0x98] sm:$0xff]
    %v279 = vld [vmem:[#allocation9 + $0xa0] sm:$0xff]
    %v280 = vld [vmem:[#allocation9 + $0xa8] sm:$0xff]
    %v281 = vld [vmem:[#allocation9 + $0xb0] sm:$0xff]
    %v282 = vld [vmem:[#allocation9 + $0xb8] sm:$0xff]
    %v283 = vld [vmem:[#allocation9 + $0xc0] sm:$0xff]
    %v284 = vld [vmem:[#allocation9 + $0xc8] sm:$0xff]
    %v285 = vld [vmem:[#allocation9 + $0xd0] sm:$0xff]
    %v286 = vld [vmem:[#allocation9 + $0xd8] sm:$0xff]
    %v287 = vld [vmem:[#allocation9 + $0xe0] sm:$0xff]
    %v288 = vld [vmem:[#allocation9 + $0xe8] sm:$0xff]
    %v289 = vld [vmem:[#allocation9 + $0xf0] sm:$0xff]
    %v290 = vld [vmem:[#allocation9 + $0xf8] sm:$0xff]
    %v291 = vld [vmem:[#allocation2] ss:$8 sm:$0xf]
    %v324 = vunpack.c.l.b16 %v259
    %v325 = vunpack.c.h.b16 %v259
    %v326 = vunpack.c.l.b16 %v260
    %v327 = vunpack.c.h.b16 %v260
    %v328 = vunpack.c.l.b16 %v261
    %v329 = vunpack.c.h.b16 %v261
    %v330 = vunpack.c.l.b16 %v262
    %v331 = vunpack.c.h.b16 %v262
    %v332 = vunpack.c.l.b16 %v263
    %v333 = vunpack.c.h.b16 %v263
    %v334 = vunpack.c.l.b16 %v264
    %v335 = vunpack.c.h.b16 %v264
    %v336 = vunpack.c.l.b16 %v265
    %v337 = vunpack.c.h.b16 %v265
    %v338 = vunpack.c.l.b16 %v266
    %v339 = vunpack.c.h.b16 %v266
    %v340 = vunpack.c.l.b16 %v267
    %v341 = vunpack.c.h.b16 %v267
    %v342 = vunpack.c.l.b16 %v268
    %v343 = vunpack.c.h.b16 %v268
    %v344 = vunpack.c.l.b16 %v269
    %v345 = vunpack.c.h.b16 %v269
    %v346 = vunpack.c.l.b16 %v270
    %v347 = vunpack.c.h.b16 %v270
    %v348 = vunpack.c.l.b16 %v271
    %v349 = vunpack.c.h.b16 %v271
    %v350 = vunpack.c.l.b16 %v272
    %v351 = vunpack.c.h.b16 %v272
    %v352 = vunpack.c.l.b16 %v273
    %v353 = vunpack.c.h.b16 %v273
    %v354 = vunpack.c.l.b16 %v274
    %v355 = vunpack.c.h.b16 %v274
    %v356 = vunpack.c.l.b16 %v275
    %v357 = vunpack.c.h.b16 %v275
    %v358 = vunpack.c.l.b16 %v276
    %v359 = vunpack.c.h.b16 %v276
    %v360 = vunpack.c.l.b16 %v277
    %v361 = vunpack.c.h.b16 %v277
    %v362 = vunpack.c.l.b16 %v278
    %v363 = vunpack.c.h.b16 %v278
    %v364 = vunpack.c.l.b16 %v279
    %v365 = vunpack.c.h.b16 %v279
    %v366 = vunpack.c.l.b16 %v280
    %v367 = vunpack.c.h.b16 %v280
    %v368 = vunpack.c.l.b16 %v281
    %v369 = vunpack.c.h.b16 %v281
    %v370 = vunpack.c.l.b16 %v282
    %v371 = vunpack.c.h.b16 %v282
    %v372 = vunpack.c.l.b16 %v283
    %v373 = vunpack.c.h.b16 %v283
    %v374 = vunpack.c.l.b16 %v284
    %v375 = vunpack.c.h.b16 %v284
    %v376 = vunpack.c.l.b16 %v285
    %v377 = vunpack.c.h.b16 %v285
    %v378 = vunpack.c.l.b16 %v286
    %v379 = vunpack.c.h.b16 %v286
    %v380 = vunpack.c.l.b16 %v287
    %v381 = vunpack.c.h.b16 %v287
    %v382 = vunpack.c.l.b16 %v288
    %v383 = vunpack.c.h.b16 %v288
    %v384 = vunpack.c.l.b16 %v289
    %v385 = vunpack.c.h.b16 %v289
    %v386 = vunpack.c.l.b16 %v290
    %v387 = vunpack.c.h.b16 %v290
    %v388 = vpack.c.b16 %v328, %v324
    %v389 = vpack.c.b16 %v329, %v325
    %v390 = vpack.c.b16 %v330, %v326
    %v391 = vpack.c.b16 %v331, %v327
    %v392 = vpack.c.b16 %v336, %v332
    %v393 = vpack.c.b16 %v337, %v333
    %v394 = vpack.c.b16 %v338, %v334
    %v395 = vpack.c.b16 %v339, %v335
    %v396 = vpack.c.b16 %v344, %v340
    %v397 = vpack.c.b16 %v345, %v341
    %v398 = vpack.c.b16 %v346, %v342
    %v399 = vpack.c.b16 %v347, %v343
    %v400 = vpack.c.b16 %v352, %v348
    %v401 = vpack.c.b16 %v353, %v349
    %v402 = vpack.c.b16 %v354, %v350
    %v403 = vpack.c.b16 %v355, %v351
    %v404 = vpack.c.b16 %v360, %v356
    %v405 = vpack.c.b16 %v361, %v357
    %v406 = vpack.c.b16 %v362, %v358
    %v407 = vpack.c.b16 %v363, %v359
    %v408 = vpack.c.b16 %v368, %v364
    %v409 = vpack.c.b16 %v369, %v365
    %v410 = vpack.c.b16 %v370, %v366
    %v411 = vpack.c.b16 %v371, %v367
    %v412 = vpack.c.b16 %v376, %v372
    %v413 = vpack.c.b16 %v377, %v373
    %v414 = vpack.c.b16 %v378, %v374
    %v415 = vpack.c.b16 %v379, %v375
    %v416 = vpack.c.b16 %v384, %v380
    %v417 = vpack.c.b16 %v385, %v381
    %v418 = vpack.c.b16 %v386, %v382
    %v419 = vpack.c.b16 %v387, %v383
    %452 = vmatprep.subr.bf16.mxu0 %v417
    %453 = vmatpush1.bf16.msra.mxu0 %v416
    %454 = vmatprep.subr.bf16.mxu0 %v413
    %455 = vmatpush1.bf16.msra.mxu0 %v412
    %456 = vmatprep.subr.bf16.mxu0 %v409
    %457 = vmatpush1.bf16.msra.mxu0 %v408
    %458 = vmatprep.subr.bf16.mxu0 %v405
    %459 = vmatpush1.bf16.msra.mxu0 %v404
    %460 = vmatprep.subr.bf16.mxu0 %v401
    %461 = vmatpush1.bf16.msra.mxu0 %v400
    %462 = vmatprep.subr.bf16.mxu0 %v397
    %463 = vmatpush1.bf16.msra.mxu0 %v396
    %464 = vmatprep.subr.bf16.mxu0 %v393
    %465 = vmatpush1.bf16.msra.mxu0 %v392
    %466 = vmatprep.subr.bf16.mxu0 %v389
    %467 = vmatpush1.bf16.msra.mxu0 %v388
    %468 = vmatprep.subr.bf16.mxu0 0
    %469 = vmatpush2.bf16.msra.mxu0 0
    %470 = vmatprep.subr.bf16.mxu0 0
    %471 = vmatpush2.bf16.msra.mxu0 0
    %472 = vmatprep.subr.bf16.mxu0 0
    %473 = vmatpush2.bf16.msra.mxu0 0
    %474 = vmatprep.subr.bf16.mxu0 0
    %475 = vmatpush2.bf16.msra.mxu0 0
    %476 = vmatprep.subr.bf16.mxu0 0
    %477 = vmatpush2.bf16.msra.mxu0 0
    %478 = vmatprep.subr.bf16.mxu0 0
    %479 = vmatpush2.bf16.msra.mxu0 0
    %480 = vmatprep.subr.bf16.mxu0 0
    %481 = vmatpush2.bf16.msra.mxu0 0
    %482 = vmatprep.subr.bf16.mxu0 0
    %483 = vmatpush2.bf16.msra.mxu0 0
    %484 = vmatprep.mubr.bf16.mxu0 0
    %485 = vmatmul.mubr.bf16.gmra.mxu0 0
    %v486 = vpop.f32.mrf.mxu0
    %v487 = vadd.f32 0.0, %v486
    %v488 = vpop.f32.mrf.mxu0
    %v489 = vadd.f32 0.0, %v488
    %v490 = vpop.f32.mrf.mxu0
    %v491 = vpop.f32.mrf.mxu0
    %492 = vdwg.mxu0
    %493 = vmatprep.subr.bf16.mxu0 %v419
    %494 = vmatpush1.bf16.msra.mxu0 %v418
    %495 = vmatprep.subr.bf16.mxu0 %v415
    %496 = vmatpush1.bf16.msra.mxu0 %v414
    %497 = vmatprep.subr.bf16.mxu0 %v411
    %498 = vmatpush1.bf16.msra.mxu0 %v410
    %499 = vmatprep.subr.bf16.mxu0 %v407
    %500 = vmatpush1.bf16.msra.mxu0 %v406
    %501 = vmatprep.subr.bf16.mxu0 %v403
    %502 = vmatpush1.bf16.msra.mxu0 %v402
    %503 = vmatprep.subr.bf16.mxu0 %v399
    %504 = vmatpush1.bf16.msra.mxu0 %v398
    %505 = vmatprep.subr.bf16.mxu0 %v395
    %506 = vmatpush1.bf16.msra.mxu0 %v394
    %507 = vmatprep.subr.bf16.mxu0 %v391
    %508 = vmatpush1.bf16.msra.mxu0 %v390
    %509 = vmatprep.subr.bf16.mxu0 0
    %510 = vmatpush2.bf16.msra.mxu0 0
    %511 = vmatprep.subr.bf16.mxu0 0
    %512 = vmatpush2.bf16.msra.mxu0 0
    %513 = vmatprep.subr.bf16.mxu0 0
    %514 = vmatpush2.bf16.msra.mxu0 0
    %515 = vmatprep.subr.bf16.mxu0 0
    %516 = vmatpush2.bf16.msra.mxu0 0
    %517 = vmatprep.subr.bf16.mxu0 0
    %518 = vmatpush2.bf16.msra.mxu0 0
    %519 = vmatprep.subr.bf16.mxu0 0
    %520 = vmatpush2.bf16.msra.mxu0 0
    %521 = vmatprep.subr.bf16.mxu0 0
    %522 = vmatpush2.bf16.msra.mxu0 0
    %523 = vmatprep.subr.bf16.mxu0 0
    %524 = vmatpush2.bf16.msra.mxu0 0
    %525 = vmatprep.mubr.bf16.mxu0 0
    %526 = vmatmul.mubr.bf16.gmra.mxu0 0
    %v527 = vpop.f32.mrf.mxu0
    %v528 = vadd.f32 0.0, %v527
    %v529 = vpop.f32.mrf.mxu0
    %v530 = vadd.f32 0.0, %v529
    %v531 = vpop.f32.mrf.mxu0
    %v532 = vpop.f32.mrf.mxu0
    %533 = vdwg.mxu0
    %v538 = vcombine.low %v487, %v489
    %v539 = vcombine.low %v528, %v530
    %v541 = vunpack.c.l.s4 1966171168
    %v542 = vunpack.c.0.s8 %v541
    %v543 = vlaneseq
    %v544 = vshrl.u32 %v543, 7
    %v545 = vsub.s32 %v542, %v544
    %v546 = vrot.slane %v538, %v545
    %v548 = vunpack.c.l.s4 1966171168
    %v549 = vunpack.c.0.s8 %v548
    %v550 = vlaneseq
    %v551 = vshrl.u32 %v550, 7
    %v552 = vsub.s32 %v549, %v551
    %v553 = vrot.slane %v539, %v552
    %v554 = vcombine.low %v546, %v553
    %v556 = vunpack.c.l.s4 1966171168
    %v557 = vunpack.c.0.s8 %v556
    %v558 = vlaneseq
    %v559 = vshrl.u32 %v558, 7
    %v560 = vsub.s32 %v557, %v559
    %v561 = vrot.slane %v554, %v560
    %v563 = vadd.f32 %v291, %v561
    %v564 = vmul.f32 %v563, 0.5
    %v565 = vtanh.pop %v564
    %v566 = vadd.f32 %v565, 1.0
    %v567 = vmul.f32 %v566, 0.5
    %v569 = vrot.slane %v563, 3
    %v571 = vtanh.pop %v569
    %v573 = vrot.slane %v567, 1
    %v575 = vmul.f32 %v573, 0.0
    %v576 = vmul.f32 %v567, %v571
    %v577 = vadd.f32 %v575, %v576
    %v578 = vtanh.pop %v577
    %v579 = vrot.slane %v567, 2
    %v581 = vmul.f32 %v579, %v578
    %582 = vst [vmem:[#allocation3] sm:$0x1] %v581
    %s583 = scalar_lea.vmem [#allocation2], 1
    %v584 = vld [vmem:[%s583] ss:$8 sm:$0xf]
    %v585 = vpack.c.bf16 %v581, %v581
    %586 = vmatprep.subr.bf16.mxu0 %v417
    %587 = vmatpush1.bf16.msra.mxu0 %v416
    %588 = vmatprep.subr.bf16.mxu0 %v413
    %589 = vmatpush1.bf16.msra.mxu0 %v412
    %590 = vmatprep.subr.bf16.mxu0 %v409
    %591 = vmatpush1.bf16.msra.mxu0 %v408
    %592 = vmatprep.subr.bf16.mxu0 %v405
    %593 = vmatpush1.bf16.msra.mxu0 %v404
    %594 = vmatprep.subr.bf16.mxu0 %v401
    %595 = vmatpush1.bf16.msra.mxu0 %v400
    %596 = vmatprep.subr.bf16.mxu0 %v397
    %597 = vmatpush1.bf16.msra.mxu0 %v396
    %598 = vmatprep.subr.bf16.mxu0 %v393
    %599 = vmatpush1.bf16.msra.mxu0 %v392
    %600 = vmatprep.subr.bf16.mxu0 %v389
    %601 = vmatpush1.bf16.msra.mxu0 %v388
    %602 = vmatprep.subr.bf16.mxu0 0
    %603 = vmatpush2.bf16.msra.mxu0 0
    %604 = vmatprep.subr.bf16.mxu0 0
    %605 = vmatpush2.bf16.msra.mxu0 0
    %606 = vmatprep.subr.bf16.mxu0 0
    %607 = vmatpush2.bf16.msra.mxu0 0
    %608 = vmatprep.subr.bf16.mxu0 0
    %609 = vmatpush2.bf16.msra.mxu0 0
    %610 = vmatprep.subr.bf16.mxu0 0
    %611 = vmatpush2.bf16.msra.mxu0 0
    %612 = vmatprep.subr.bf16.mxu0 0
    %613 = vmatpush2.bf16.msra.mxu0 0
    %614 = vmatprep.subr.bf16.mxu0 0
    %615 = vmatpush2.bf16.msra.mxu0 0
    %616 = vmatprep.subr.bf16.mxu0 0
    %617 = vmatpush2.bf16.msra.mxu0 0
    %618 = vmatprep.mubr.bf16.mxu0 0
    %619 = vmatmul.mubr.bf16.gmra.mxu0 %v585
    %v620 = vpop.f32.mrf.mxu0
    %v621 = vadd.f32 0.0, %v620
    %v622 = vpop.f32.mrf.mxu0
    %v623 = vadd.f32 0.0, %v622
    %v624 = vpop.f32.mrf.mxu0
    %v625 = vpop.f32.mrf.mxu0
    %626 = vdwg.mxu0
    %627 = vmatprep.subr.bf16.mxu0 %v419
    %628 = vmatpush1.bf16.msra.mxu0 %v418
    %629 = vmatprep.subr.bf16.mxu0 %v415
    %630 = vmatpush1.bf16.msra.mxu0 %v414
    %631 = vmatprep.subr.bf16.mxu0 %v411
    %632 = vmatpush1.bf16.msra.mxu0 %v410
    %633 = vmatprep.subr.bf16.mxu0 %v407
    %634 = vmatpush1.bf16.msra.mxu0 %v406
    %635 = vmatprep.subr.bf16.mxu0 %v403
    %636 = vmatpush1.bf16.msra.mxu0 %v402
    %637 = vmatprep.subr.bf16.mxu0 %v399
    %638 = vmatpush1.bf16.msra.mxu0 %v398
    %639 = vmatprep.subr.bf16.mxu0 %v395
    %640 = vmatpush1.bf16.msra.mxu0 %v394
    %641 = vmatprep.subr.bf16.mxu0 %v391
    %642 = vmatpush1.bf16.msra.mxu0 %v390
    %643 = vmatprep.subr.bf16.mxu0 0
    %644 = vmatpush2.bf16.msra.mxu0 0
    %645 = vmatprep.subr.bf16.mxu0 0
    %646 = vmatpush2.bf16.msra.mxu0 0
    %647 = vmatprep.subr.bf16.mxu0 0
    %648 = vmatpush2.bf16.msra.mxu0 0
    %649 = vmatprep.subr.bf16.mxu0 0
    %650 = vmatpush2.bf16.msra.mxu0 0
    %651 = vmatprep.subr.bf16.mxu0 0
    %652 = vmatpush2.bf16.msra.mxu0 0
    %653 = vmatprep.subr.bf16.mxu0 0
    %654 = vmatpush2.bf16.msra.mxu0 0
    %655 = vmatprep.subr.bf16.mxu0 0
    %656 = vmatpush2.bf16.msra.mxu0 0
    %657 = vmatprep.subr.bf16.mxu0 0
    %658 = vmatpush2.bf16.msra.mxu0 0
    %659 = vmatprep.mubr.bf16.mxu0 0
    %660 = vmatmul.mubr.bf16.gmra.mxu0 %v585
    %v661 = vpop.f32.mrf.mxu0
    %v662 = vadd.f32 0.0, %v661
    %v663 = vpop.f32.mrf.mxu0
    %v664 = vadd.f32 0.0, %v663
    %v665 = vpop.f32.mrf.mxu0
    %v666 = vpop.f32.mrf.mxu0
    %667 = vdwg.mxu0
    %v672 = vcombine.low %v621, %v623
    %v673 = vcombine.low %v662, %v664
    %v675 = vunpack.c.l.s4 1966171168
    %v676 = vunpack.c.0.s8 %v675
    %v677 = vlaneseq
    %v678 = vshrl.u32 %v677, 7
    %v679 = vsub.s32 %v676, %v678
    %v680 = vrot.slane %v672, %v679
    %v682 = vunpack.c.l.s4 1966171168
    %v683 = vunpack.c.0.s8 %v682
    %v684 = vlaneseq
    %v685 = vshrl.u32 %v684, 7
    %v686 = vsub.s32 %v683, %v685
    %v687 = vrot.slane %v673, %v686
    %v688 = vcombine.low %v680, %v687
    %v690 = vunpack.c.l.s4 1966171168
    %v691 = vunpack.c.0.s8 %v690
    %v692 = vlaneseq
    %v693 = vshrl.u32 %v692, 7
    %v694 = vsub.s32 %v691, %v693
    %v695 = vrot.slane %v688, %v694
    %v697 = vadd.f32 %v584, %v695
    %v698 = vmul.f32 %v697, 0.5
    %v699 = vtanh.pop %v698
    %v700 = vadd.f32 %v699, 1.0
    %v701 = vmul.f32 %v700, 0.5
    %v703 = vrot.slane %v697, 3
    %v705 = vtanh.pop %v703
    %v707 = vrot.slane %v701, 1
    %v709 = vmul.f32 %v707, %v577
    %v710 = vmul.f32 %v701, %v705
    %v711 = vadd.f32 %v709, %v710
    %v712 = vtanh.pop %v711
    %v713 = vrot.slane %v701, 2
    %v715 = vmul.f32 %v713, %v712
    %716 = vst [vmem:[#allocation3 + $0x1] sm:$0x1] %v715
    %s717 = scalar_lea.vmem [#allocation2], 2
    %v718 = vld [vmem:[%s717] ss:$8 sm:$0xf]
    %v719 = vpack.c.bf16 %v715, %v715
    %720 = vmatprep.subr.bf16.mxu0 %v417
    %721 = vmatpush1.bf16.msra.mxu0 %v416
    %722 = vmatprep.subr.bf16.mxu0 %v413
    %723 = vmatpush1.bf16.msra.mxu0 %v412
    %724 = vmatprep.subr.bf16.mxu0 %v409
    %725 = vmatpush1.bf16.msra.mxu0 %v408
    %726 = vmatprep.subr.bf16.mxu0 %v405
    %727 = vmatpush1.bf16.msra.mxu0 %v404
    %728 = vmatprep.subr.bf16.mxu0 %v401
    %729 = vmatpush1.bf16.msra.mxu0 %v400
    %730 = vmatprep.subr.bf16.mxu0 %v397
    %731 = vmatpush1.bf16.msra.mxu0 %v396
    %732 = vmatprep.subr.bf16.mxu0 %v393
    %733 = vmatpush1.bf16.msra.mxu0 %v392
    %734 = vmatprep.subr.bf16.mxu0 %v389
    %735 = vmatpush1.bf16.msra.mxu0 %v388
    %736 = vmatprep.subr.bf16.mxu0 0
    %737 = vmatpush2.bf16.msra.mxu0 0
    %738 = vmatprep.subr.bf16.mxu0 0
    %739 = vmatpush2.bf16.msra.mxu0 0
    %740 = vmatprep.subr.bf16.mxu0 0
    %741 = vmatpush2.bf16.msra.mxu0 0
    %742 = vmatprep.subr.bf16.mxu0 0
    %743 = vmatpush2.bf16.msra.mxu0 0
    %744 = vmatprep.subr.bf16.mxu0 0
    %745 = vmatpush2.bf16.msra.mxu0 0
    %746 = vmatprep.subr.bf16.mxu0 0
    %747 = vmatpush2.bf16.msra.mxu0 0
    %748 = vmatprep.subr.bf16.mxu0 0
    %749 = vmatpush2.bf16.msra.mxu0 0
    %750 = vmatprep.subr.bf16.mxu0 0
    %751 = vmatpush2.bf16.msra.mxu0 0
    %752 = vmatprep.mubr.bf16.mxu0 0
    %753 = vmatmul.mubr.bf16.gmra.mxu0 %v719
    %v754 = vpop.f32.mrf.mxu0
    %v755 = vadd.f32 0.0, %v754
    %v756 = vpop.f32.mrf.mxu0
    %v757 = vadd.f32 0.0, %v756
    %v758 = vpop.f32.mrf.mxu0
    %v759 = vpop.f32.mrf.mxu0
    %760 = vdwg.mxu0
    %761 = vmatprep.subr.bf16.mxu0 %v419
    %762 = vmatpush1.bf16.msra.mxu0 %v418
    %763 = vmatprep.subr.bf16.mxu0 %v415
    %764 = vmatpush1.bf16.msra.mxu0 %v414
    %765 = vmatprep.subr.bf16.mxu0 %v411
    %766 = vmatpush1.bf16.msra.mxu0 %v410
    %767 = vmatprep.subr.bf16.mxu0 %v407
    %768 = vmatpush1.bf16.msra.mxu0 %v406
    %769 = vmatprep.subr.bf16.mxu0 %v403
    %770 = vmatpush1.bf16.msra.mxu0 %v402
    %771 = vmatprep.subr.bf16.mxu0 %v399
    %772 = vmatpush1.bf16.msra.mxu0 %v398
    %773 = vmatprep.subr.bf16.mxu0 %v395
    %774 = vmatpush1.bf16.msra.mxu0 %v394
    %775 = vmatprep.subr.bf16.mxu0 %v391
    %776 = vmatpush1.bf16.msra.mxu0 %v390
    %777 = vmatprep.subr.bf16.mxu0 0
    %778 = vmatpush2.bf16.msra.mxu0 0
    %779 = vmatprep.subr.bf16.mxu0 0
    %780 = vmatpush2.bf16.msra.mxu0 0
    %781 = vmatprep.subr.bf16.mxu0 0
    %782 = vmatpush2.bf16.msra.mxu0 0
    %783 = vmatprep.subr.bf16.mxu0 0
    %784 = vmatpush2.bf16.msra.mxu0 0
    %785 = vmatprep.subr.bf16.mxu0 0
    %786 = vmatpush2.bf16.msra.mxu0 0
    %787 = vmatprep.subr.bf16.mxu0 0
    %788 = vmatpush2.bf16.msra.mxu0 0
    %789 = vmatprep.subr.bf16.mxu0 0
    %790 = vmatpush2.bf16.msra.mxu0 0
    %791 = vmatprep.subr.bf16.mxu0 0
    %792 = vmatpush2.bf16.msra.mxu0 0
    %793 = vmatprep.mubr.bf16.mxu0 0
    %794 = vmatmul.mubr.bf16.gmra.mxu0 %v719
    %v795 = vpop.f32.mrf.mxu0
    %v796 = vadd.f32 0.0, %v795
    %v797 = vpop.f32.mrf.mxu0
    %v798 = vadd.f32 0.0, %v797
    %v799 = vpop.f32.mrf.mxu0
    %v800 = vpop.f32.mrf.mxu0
    %801 = vdwg.mxu0
    %v806 = vcombine.low %v755, %v757
    %v807 = vcombine.low %v796, %v798
    %v809 = vunpack.c.l.s4 1966171168
    %v810 = vunpack.c.0.s8 %v809
    %v811 = vlaneseq
    %v812 = vshrl.u32 %v811, 7
    %v813 = vsub.s32 %v810, %v812
    %v814 = vrot.slane %v806, %v813
    %v816 = vunpack.c.l.s4 1966171168
    %v817 = vunpack.c.0.s8 %v816
    %v818 = vlaneseq
    %v819 = vshrl.u32 %v818, 7
    %v820 = vsub.s32 %v817, %v819
    %v821 = vrot.slane %v807, %v820
    %v822 = vcombine.low %v814, %v821
    %v824 = vunpack.c.l.s4 1966171168
    %v825 = vunpack.c.0.s8 %v824
    %v826 = vlaneseq
    %v827 = vshrl.u32 %v826, 7
    %v828 = vsub.s32 %v825, %v827
    %v829 = vrot.slane %v822, %v828
    %v831 = vadd.f32 %v718, %v829
    %v832 = vmul.f32 %v831, 0.5
    %v833 = vtanh.pop %v832
    %v834 = vadd.f32 %v833, 1.0
    %v835 = vmul.f32 %v834, 0.5
    %v837 = vrot.slane %v831, 3
    %v839 = vtanh.pop %v837
    %v841 = vrot.slane %v835, 1
    %v843 = vmul.f32 %v841, %v711
    %v844 = vmul.f32 %v835, %v839
    %v845 = vadd.f32 %v843, %v844
    %v846 = vtanh.pop %v845
    %v847 = vrot.slane %v835, 2
    %v849 = vmul.f32 %v847, %v846
    %850 = vst [vmem:[#allocation3 + $0x2] sm:$0x1] %v849
    %s851 = scalar_lea.vmem [#allocation2], 3
    %v852 = vld [vmem:[%s851] ss:$8 sm:$0xf]
    %v853 = vpack.c.bf16 %v849, %v849
    %854 = vmatprep.subr.bf16.mxu0 %v417
    %855 = vmatpush1.bf16.msra.mxu0 %v416
    %856 = vmatprep.subr.bf16.mxu0 %v413
    %857 = vmatpush1.bf16.msra.mxu0 %v412
    %858 = vmatprep.subr.bf16.mxu0 %v409
    %859 = vmatpush1.bf16.msra.mxu0 %v408
    %860 = vmatprep.subr.bf16.mxu0 %v405
    %861 = vmatpush1.bf16.msra.mxu0 %v404
    %862 = vmatprep.subr.bf16.mxu0 %v401
    %863 = vmatpush1.bf16.msra.mxu0 %v400
    %864 = vmatprep.subr.bf16.mxu0 %v397
    %865 = vmatpush1.bf16.msra.mxu0 %v396
    %866 = vmatprep.subr.bf16.mxu0 %v393
    %867 = vmatpush1.bf16.msra.mxu0 %v392
    %868 = vmatprep.subr.bf16.mxu0 %v389
    %869 = vmatpush1.bf16.msra.mxu0 %v388
    %870 = vmatprep.subr.bf16.mxu0 0
    %871 = vmatpush2.bf16.msra.mxu0 0
    %872 = vmatprep.subr.bf16.mxu0 0
    %873 = vmatpush2.bf16.msra.mxu0 0
    %874 = vmatprep.subr.bf16.mxu0 0
    %875 = vmatpush2.bf16.msra.mxu0 0
    %876 = vmatprep.subr.bf16.mxu0 0
    %877 = vmatpush2.bf16.msra.mxu0 0
    %878 = vmatprep.subr.bf16.mxu0 0
    %879 = vmatpush2.bf16.msra.mxu0 0
    %880 = vmatprep.subr.bf16.mxu0 0
    %881 = vmatpush2.bf16.msra.mxu0 0
    %882 = vmatprep.subr.bf16.mxu0 0
    %883 = vmatpush2.bf16.msra.mxu0 0
    %884 = vmatprep.subr.bf16.mxu0 0
    %885 = vmatpush2.bf16.msra.mxu0 0
    %886 = vmatprep.mubr.bf16.mxu0 0
    %887 = vmatmul.mubr.bf16.gmra.mxu0 %v853
    %v888 = vpop.f32.mrf.mxu0
    %v889 = vadd.f32 0.0, %v888
    %v890 = vpop.f32.mrf.mxu0
    %v891 = vadd.f32 0.0, %v890
    %v892 = vpop.f32.mrf.mxu0
    %v893 = vpop.f32.mrf.mxu0
    %894 = vdwg.mxu0
    %895 = vmatprep.subr.bf16.mxu0 %v419
    %896 = vmatpush1.bf16.msra.mxu0 %v418
    %897 = vmatprep.subr.bf16.mxu0 %v415
    %898 = vmatpush1.bf16.msra.mxu0 %v414
    %899 = vmatprep.subr.bf16.mxu0 %v411
    %900 = vmatpush1.bf16.msra.mxu0 %v410
    %901 = vmatprep.subr.bf16.mxu0 %v407
    %902 = vmatpush1.bf16.msra.mxu0 %v406
    %903 = vmatprep.subr.bf16.mxu0 %v403
    %904 = vmatpush1.bf16.msra.mxu0 %v402
    %905 = vmatprep.subr.bf16.mxu0 %v399
    %906 = vmatpush1.bf16.msra.mxu0 %v398
    %907 = vmatprep.subr.bf16.mxu0 %v395
    %908 = vmatpush1.bf16.msra.mxu0 %v394
    %909 = vmatprep.subr.bf16.mxu0 %v391
    %910 = vmatpush1.bf16.msra.mxu0 %v390
    %911 = vmatprep.subr.bf16.mxu0 0
    %912 = vmatpush2.bf16.msra.mxu0 0
    %913 = vmatprep.subr.bf16.mxu0 0
    %914 = vmatpush2.bf16.msra.mxu0 0
    %915 = vmatprep.subr.bf16.mxu0 0
    %916 = vmatpush2.bf16.msra.mxu0 0
    %917 = vmatprep.subr.bf16.mxu0 0
    %918 = vmatpush2.bf16.msra.mxu0 0
    %919 = vmatprep.subr.bf16.mxu0 0
    %920 = vmatpush2.bf16.msra.mxu0 0
    %921 = vmatprep.subr.bf16.mxu0 0
    %922 = vmatpush2.bf16.msra.mxu0 0
    %923 = vmatprep.subr.bf16.mxu0 0
    %924 = vmatpush2.bf16.msra.mxu0 0
    %925 = vmatprep.subr.bf16.mxu0 0
    %926 = vmatpush2.bf16.msra.mxu0 0
    %927 = vmatprep.mubr.bf16.mxu0 0
    %928 = vmatmul.mubr.bf16.gmra.mxu0 %v853
    %v929 = vpop.f32.mrf.mxu0
    %v930 = vadd.f32 0.0, %v929
    %v931 = vpop.f32.mrf.mxu0
    %v932 = vadd.f32 0.0, %v931
    %v933 = vpop.f32.mrf.mxu0
    %v934 = vpop.f32.mrf.mxu0
    %935 = vdwg.mxu0
    %v940 = vcombine.low %v889, %v891
    %v941 = vcombine.low %v930, %v932
    %v943 = vunpack.c.l.s4 1966171168
    %v944 = vunpack.c.0.s8 %v943
    %v945 = vlaneseq
    %v946 = vshrl.u32 %v945, 7
    %v947 = vsub.s32 %v944, %v946
    %v948 = vrot.slane %v940, %v947
    %v950 = vunpack.c.l.s4 1966171168
    %v951 = vunpack.c.0.s8 %v950
    %v952 = vlaneseq
    %v953 = vshrl.u32 %v952, 7
    %v954 = vsub.s32 %v951, %v953
    %v955 = vrot.slane %v941, %v954
    %v956 = vcombine.low %v948, %v955
    %v958 = vunpack.c.l.s4 1966171168
    %v959 = vunpack.c.0.s8 %v958
    %v960 = vlaneseq
    %v961 = vshrl.u32 %v960, 7
    %v962 = vsub.s32 %v959, %v961
    %v963 = vrot.slane %v956, %v962
    %v965 = vadd.f32 %v852, %v963
    %v966 = vmul.f32 %v965, 0.5
    %v967 = vtanh.pop %v966
    %v968 = vadd.f32 %v967, 1.0
    %v969 = vmul.f32 %v968, 0.5
    %v971 = vrot.slane %v965, 3
    %v973 = vtanh.pop %v971
    %v975 = vrot.slane %v969, 1
    %v977 = vmul.f32 %v975, %v845
    %v978 = vmul.f32 %v969, %v973
    %v979 = vadd.f32 %v977, %v978
    %v980 = vtanh.pop %v979
    %v981 = vrot.slane %v969, 2
    %v983 = vmul.f32 %v981, %v980
    %984 = vst [vmem:[#allocation3 + $0x3] sm:$0x1] %v983
    %s985 = scalar_lea.vmem [#allocation2], 4
    %v986 = vld [vmem:[%s985] ss:$8 sm:$0xf]
    %v987 = vpack.c.bf16 %v983, %v983
    %988 = vmatprep.subr.bf16.mxu0 %v417
    %989 = vmatpush1.bf16.msra.mxu0 %v416
    %990 = vmatprep.subr.bf16.mxu0 %v413
    %991 = vmatpush1.bf16.msra.mxu0 %v412
    %992 = vmatprep.subr.bf16.mxu0 %v409
    %993 = vmatpush1.bf16.msra.mxu0 %v408
    %994 = vmatprep.subr.bf16.mxu0 %v405
    %995 = vmatpush1.bf16.msra.mxu0 %v404
    %996 = vmatprep.subr.bf16.mxu0 %v401
    %997 = vmatpush1.bf16.msra.mxu0 %v400
    %998 = vmatprep.subr.bf16.mxu0 %v397
    %999 = vmatpush1.bf16.msra.mxu0 %v396
    %1000 = vmatprep.subr.bf16.mxu0 %v393
    %1001 = vmatpush1.bf16.msra.mxu0 %v392
    %1002 = vmatprep.subr.bf16.mxu0 %v389
    %1003 = vmatpush1.bf16.msra.mxu0 %v388
    %1004 = vmatprep.subr.bf16.mxu0 0
    %1005 = vmatpush2.bf16.msra.mxu0 0
    %1006 = vmatprep.subr.bf16.mxu0 0
    %1007 = vmatpush2.bf16.msra.mxu0 0
    %1008 = vmatprep.subr.bf16.mxu0 0
    %1009 = vmatpush2.bf16.msra.mxu0 0
    %1010 = vmatprep.subr.bf16.mxu0 0
    %1011 = vmatpush2.bf16.msra.mxu0 0
    %1012 = vmatprep.subr.bf16.mxu0 0
    %1013 = vmatpush2.bf16.msra.mxu0 0
    %1014 = vmatprep.subr.bf16.mxu0 0
    %1015 = vmatpush2.bf16.msra.mxu0 0
    %1016 = vmatprep.subr.bf16.mxu0 0
    %1017 = vmatpush2.bf16.msra.mxu0 0
    %1018 = vmatprep.subr.bf16.mxu0 0
    %1019 = vmatpush2.bf16.msra.mxu0 0
    %1020 = vmatprep.mubr.bf16.mxu0 0
    %1021 = vmatmul.mubr.bf16.gmra.mxu0 %v987
    %v1022 = vpop.f32.mrf.mxu0
    %v1023 = vadd.f32 0.0, %v1022
    %v1024 = vpop.f32.mrf.mxu0
    %v1025 = vadd.f32 0.0, %v1024
    %v1026 = vpop.f32.mrf.mxu0
    %v1027 = vpop.f32.mrf.mxu0
    %1028 = vdwg.mxu0
    %1029 = vmatprep.subr.bf16.mxu0 %v419
    %1030 = vmatpush1.bf16.msra.mxu0 %v418
    %1031 = vmatprep.subr.bf16.mxu0 %v415
    %1032 = vmatpush1.bf16.msra.mxu0 %v414
    %1033 = vmatprep.subr.bf16.mxu0 %v411
    %1034 = vmatpush1.bf16.msra.mxu0 %v410
    %1035 = vmatprep.subr.bf16.mxu0 %v407
    %1036 = vmatpush1.bf16.msra.mxu0 %v406
    %1037 = vmatprep.subr.bf16.mxu0 %v403
    %1038 = vmatpush1.bf16.msra.mxu0 %v402
    %1039 = vmatprep.subr.bf16.mxu0 %v399
    %1040 = vmatpush1.bf16.msra.mxu0 %v398
    %1041 = vmatprep.subr.bf16.mxu0 %v395
    %1042 = vmatpush1.bf16.msra.mxu0 %v394
    %1043 = vmatprep.subr.bf16.mxu0 %v391
    %1044 = vmatpush1.bf16.msra.mxu0 %v390
    %1045 = vmatprep.subr.bf16.mxu0 0
    %1046 = vmatpush2.bf16.msra.mxu0 0
    %1047 = vmatprep.subr.bf16.mxu0 0
    %1048 = vmatpush2.bf16.msra.mxu0 0
    %1049 = vmatprep.subr.bf16.mxu0 0
    %1050 = vmatpush2.bf16.msra.mxu0 0
    %1051 = vmatprep.subr.bf16.mxu0 0
    %1052 = vmatpush2.bf16.msra.mxu0 0
    %1053 = vmatprep.subr.bf16.mxu0 0
    %1054 = vmatpush2.bf16.msra.mxu0 0
    %1055 = vmatprep.subr.bf16.mxu0 0
    %1056 = vmatpush2.bf16.msra.mxu0 0
    %1057 = vmatprep.subr.bf16.mxu0 0
    %1058 = vmatpush2.bf16.msra.mxu0 0
    %1059 = vmatprep.subr.bf16.mxu0 0
    %1060 = vmatpush2.bf16.msra.mxu0 0
    %1061 = vmatprep.mubr.bf16.mxu0 0
    %1062 = vmatmul.mubr.bf16.gmra.mxu0 %v987
    %v1063 = vpop.f32.mrf.mxu0
    %v1064 = vadd.f32 0.0, %v1063
    %v1065 = vpop.f32.mrf.mxu0
    %v1066 = vadd.f32 0.0, %v1065
    %v1067 = vpop.f32.mrf.mxu0
    %v1068 = vpop.f32.mrf.mxu0
    %1069 = vdwg.mxu0
    %v1074 = vcombine.low %v1023, %v1025
    %v1075 = vcombine.low %v1064, %v1066
    %v1077 = vunpack.c.l.s4 1966171168
    %v1078 = vunpack.c.0.s8 %v1077
    %v1079 = vlaneseq
    %v1080 = vshrl.u32 %v1079, 7
    %v1081 = vsub.s32 %v1078, %v1080
    %v1082 = vrot.slane %v1074, %v1081
    %v1084 = vunpack.c.l.s4 1966171168
    %v1085 = vunpack.c.0.s8 %v1084
    %v1086 = vlaneseq
    %v1087 = vshrl.u32 %v1086, 7
    %v1088 = vsub.s32 %v1085, %v1087
    %v1089 = vrot.slane %v1075, %v1088
    %v1090 = vcombine.low %v1082, %v1089
    %v1092 = vunpack.c.l.s4 1966171168
    %v1093 = vunpack.c.0.s8 %v1092
    %v1094 = vlaneseq
    %v1095 = vshrl.u32 %v1094, 7
    %v1096 = vsub.s32 %v1093, %v1095
    %v1097 = vrot.slane %v1090, %v1096
    %v1099 = vadd.f32 %v986, %v1097
    %v1100 = vmul.f32 %v1099, 0.5
    %v1101 = vtanh.pop %v1100
    %v1102 = vadd.f32 %v1101, 1.0
    %v1103 = vmul.f32 %v1102, 0.5
    %v1105 = vrot.slane %v1099, 3
    %v1107 = vtanh.pop %v1105
    %v1109 = vrot.slane %v1103, 1
    %v1111 = vmul.f32 %v1109, %v979
    %v1112 = vmul.f32 %v1103, %v1107
    %v1113 = vadd.f32 %v1111, %v1112
    %v1114 = vtanh.pop %v1113
    %v1115 = vrot.slane %v1103, 2
    %v1117 = vmul.f32 %v1115, %v1114
    %1118 = vst [vmem:[#allocation3 + $0x4] sm:$0x1] %v1117
    %s1119 = scalar_lea.vmem [#allocation2], 5
    %v1120 = vld [vmem:[%s1119] ss:$8 sm:$0xf]
    %v1121 = vpack.c.bf16 %v1117, %v1117
    %1122 = vmatprep.subr.bf16.mxu0 %v417
    %1123 = vmatpush1.bf16.msra.mxu0 %v416
    %1124 = vmatprep.subr.bf16.mxu0 %v413
    %1125 = vmatpush1.bf16.msra.mxu0 %v412
    %1126 = vmatprep.subr.bf16.mxu0 %v409
    %1127 = vmatpush1.bf16.msra.mxu0 %v408
    %1128 = vmatprep.subr.bf16.mxu0 %v405
    %1129 = vmatpush1.bf16.msra.mxu0 %v404
    %1130 = vmatprep.subr.bf16.mxu0 %v401
    %1131 = vmatpush1.bf16.msra.mxu0 %v400
    %1132 = vmatprep.subr.bf16.mxu0 %v397
    %1133 = vmatpush1.bf16.msra.mxu0 %v396
    %1134 = vmatprep.subr.bf16.mxu0 %v393
    %1135 = vmatpush1.bf16.msra.mxu0 %v392
    %1136 = vmatprep.subr.bf16.mxu0 %v389
    %1137 = vmatpush1.bf16.msra.mxu0 %v388
    %1138 = vmatprep.subr.bf16.mxu0 0
    %1139 = vmatpush2.bf16.msra.mxu0 0
    %1140 = vmatprep.subr.bf16.mxu0 0
    %1141 = vmatpush2.bf16.msra.mxu0 0
    %1142 = vmatprep.subr.bf16.mxu0 0
    %1143 = vmatpush2.bf16.msra.mxu0 0
    %1144 = vmatprep.subr.bf16.mxu0 0
    %1145 = vmatpush2.bf16.msra.mxu0 0
    %1146 = vmatprep.subr.bf16.mxu0 0
    %1147 = vmatpush2.bf16.msra.mxu0 0
    %1148 = vmatprep.subr.bf16.mxu0 0
    %1149 = vmatpush2.bf16.msra.mxu0 0
    %1150 = vmatprep.subr.bf16.mxu0 0
    %1151 = vmatpush2.bf16.msra.mxu0 0
    %1152 = vmatprep.subr.bf16.mxu0 0
    %1153 = vmatpush2.bf16.msra.mxu0 0
    %1154 = vmatprep.mubr.bf16.mxu0 0
    %1155 = vmatmul.mubr.bf16.gmra.mxu0 %v1121
    %v1156 = vpop.f32.mrf.mxu0
    %v1157 = vadd.f32 0.0, %v1156
    %v1158 = vpop.f32.mrf.mxu0
    %v1159 = vadd.f32 0.0, %v1158
    %v1160 = vpop.f32.mrf.mxu0
    %v1161 = vpop.f32.mrf.mxu0
    %1162 = vdwg.mxu0
    %1163 = vmatprep.subr.bf16.mxu0 %v419
    %1164 = vmatpush1.bf16.msra.mxu0 %v418
    %1165 = vmatprep.subr.bf16.mxu0 %v415
    %1166 = vmatpush1.bf16.msra.mxu0 %v414
    %1167 = vmatprep.subr.bf16.mxu0 %v411
    %1168 = vmatpush1.bf16.msra.mxu0 %v410
    %1169 = vmatprep.subr.bf16.mxu0 %v407
    %1170 = vmatpush1.bf16.msra.mxu0 %v406
    %1171 = vmatprep.subr.bf16.mxu0 %v403
    %1172 = vmatpush1.bf16.msra.mxu0 %v402
    %1173 = vmatprep.subr.bf16.mxu0 %v399
    %1174 = vmatpush1.bf16.msra.mxu0 %v398
    %1175 = vmatprep.subr.bf16.mxu0 %v395
    %1176 = vmatpush1.bf16.msra.mxu0 %v394
    %1177 = vmatprep.subr.bf16.mxu0 %v391
    %1178 = vmatpush1.bf16.msra.mxu0 %v390
    %1179 = vmatprep.subr.bf16.mxu0 0
    %1180 = vmatpush2.bf16.msra.mxu0 0
    %1181 = vmatprep.subr.bf16.mxu0 0
    %1182 = vmatpush2.bf16.msra.mxu0 0
    %1183 = vmatprep.subr.bf16.mxu0 0
    %1184 = vmatpush2.bf16.msra.mxu0 0
    %1185 = vmatprep.subr.bf16.mxu0 0
    %1186 = vmatpush2.bf16.msra.mxu0 0
    %1187 = vmatprep.subr.bf16.mxu0 0
    %1188 = vmatpush2.bf16.msra.mxu0 0
    %1189 = vmatprep.subr.bf16.mxu0 0
    %1190 = vmatpush2.bf16.msra.mxu0 0
    %1191 = vmatprep.subr.bf16.mxu0 0
    %1192 = vmatpush2.bf16.msra.mxu0 0
    %1193 = vmatprep.subr.bf16.mxu0 0
    %1194 = vmatpush2.bf16.msra.mxu0 0
    %1195 = vmatprep.mubr.bf16.mxu0 0
    %1196 = vmatmul.mubr.bf16.gmra.mxu0 %v1121
    %v1197 = vpop.f32.mrf.mxu0
    %v1198 = vadd.f32 0.0, %v1197
    %v1199 = vpop.f32.mrf.mxu0
    %v1200 = vadd.f32 0.0, %v1199
    %v1201 = vpop.f32.mrf.mxu0
    %v1202 = vpop.f32.mrf.mxu0
    %1203 = vdwg.mxu0
    %v1208 = vcombine.low %v1157, %v1159
    %v1209 = vcombine.low %v1198, %v1200
    %v1211 = vunpack.c.l.s4 1966171168
    %v1212 = vunpack.c.0.s8 %v1211
    %v1213 = vlaneseq
    %v1214 = vshrl.u32 %v1213, 7
    %v1215 = vsub.s32 %v1212, %v1214
    %v1216 = vrot.slane %v1208, %v1215
    %v1218 = vunpack.c.l.s4 1966171168
    %v1219 = vunpack.c.0.s8 %v1218
    %v1220 = vlaneseq
    %v1221 = vshrl.u32 %v1220, 7
    %v1222 = vsub.s32 %v1219, %v1221
    %v1223 = vrot.slane %v1209, %v1222
    %v1224 = vcombine.low %v1216, %v1223
    %v1226 = vunpack.c.l.s4 1966171168
    %v1227 = vunpack.c.0.s8 %v1226
    %v1228 = vlaneseq
    %v1229 = vshrl.u32 %v1228, 7
    %v1230 = vsub.s32 %v1227, %v1229
    %v1231 = vrot.slane %v1224, %v1230
    %v1233 = vadd.f32 %v1120, %v1231
    %v1234 = vmul.f32 %v1233, 0.5
    %v1235 = vtanh.pop %v1234
    %v1236 = vadd.f32 %v1235, 1.0
    %v1237 = vmul.f32 %v1236, 0.5
    %v1239 = vrot.slane %v1233, 3
    %v1241 = vtanh.pop %v1239
    %v1243 = vrot.slane %v1237, 1
    %v1245 = vmul.f32 %v1243, %v1113
    %v1246 = vmul.f32 %v1237, %v1241
    %v1247 = vadd.f32 %v1245, %v1246
    %v1248 = vtanh.pop %v1247
    %v1249 = vrot.slane %v1237, 2
    %v1251 = vmul.f32 %v1249, %v1248
    %1252 = vst [vmem:[#allocation3 + $0x5] sm:$0x1] %v1251
    %s1253 = scalar_lea.vmem [#allocation2], 6
    %v1254 = vld [vmem:[%s1253] ss:$8 sm:$0xf]
    %v1255 = vpack.c.bf16 %v1251, %v1251
    %1256 = vmatprep.subr.bf16.mxu0 %v417
    %1257 = vmatpush1.bf16.msra.mxu0 %v416
    %1258 = vmatprep.subr.bf16.mxu0 %v413
    %1259 = vmatpush1.bf16.msra.mxu0 %v412
    %1260 = vmatprep.subr.bf16.mxu0 %v409
    %1261 = vmatpush1.bf16.msra.mxu0 %v408
    %1262 = vmatprep.subr.bf16.mxu0 %v405
    %1263 = vmatpush1.bf16.msra.mxu0 %v404
    %1264 = vmatprep.subr.bf16.mxu0 %v401
    %1265 = vmatpush1.bf16.msra.mxu0 %v400
    %1266 = vmatprep.subr.bf16.mxu0 %v397
    %1267 = vmatpush1.bf16.msra.mxu0 %v396
    %1268 = vmatprep.subr.bf16.mxu0 %v393
    %1269 = vmatpush1.bf16.msra.mxu0 %v392
    %1270 = vmatprep.subr.bf16.mxu0 %v389
    %1271 = vmatpush1.bf16.msra.mxu0 %v388
    %1272 = vmatprep.subr.bf16.mxu0 0
    %1273 = vmatpush2.bf16.msra.mxu0 0
    %1274 = vmatprep.subr.bf16.mxu0 0
    %1275 = vmatpush2.bf16.msra.mxu0 0
    %1276 = vmatprep.subr.bf16.mxu0 0
    %1277 = vmatpush2.bf16.msra.mxu0 0
    %1278 = vmatprep.subr.bf16.mxu0 0
    %1279 = vmatpush2.bf16.msra.mxu0 0
    %1280 = vmatprep.subr.bf16.mxu0 0
    %1281 = vmatpush2.bf16.msra.mxu0 0
    %1282 = vmatprep.subr.bf16.mxu0 0
    %1283 = vmatpush2.bf16.msra.mxu0 0
    %1284 = vmatprep.subr.bf16.mxu0 0
    %1285 = vmatpush2.bf16.msra.mxu0 0
    %1286 = vmatprep.subr.bf16.mxu0 0
    %1287 = vmatpush2.bf16.msra.mxu0 0
    %1288 = vmatprep.mubr.bf16.mxu0 0
    %1289 = vmatmul.mubr.bf16.gmra.mxu0 %v1255
    %v1290 = vpop.f32.mrf.mxu0
    %v1291 = vadd.f32 0.0, %v1290
    %v1292 = vpop.f32.mrf.mxu0
    %v1293 = vadd.f32 0.0, %v1292
    %v1294 = vpop.f32.mrf.mxu0
    %v1295 = vpop.f32.mrf.mxu0
    %1296 = vdwg.mxu0
    %1297 = vmatprep.subr.bf16.mxu0 %v419
    %1298 = vmatpush1.bf16.msra.mxu0 %v418
    %1299 = vmatprep.subr.bf16.mxu0 %v415
    %1300 = vmatpush1.bf16.msra.mxu0 %v414
    %1301 = vmatprep.subr.bf16.mxu0 %v411
    %1302 = vmatpush1.bf16.msra.mxu0 %v410
    %1303 = vmatprep.subr.bf16.mxu0 %v407
    %1304 = vmatpush1.bf16.msra.mxu0 %v406
    %1305 = vmatprep.subr.bf16.mxu0 %v403
    %1306 = vmatpush1.bf16.msra.mxu0 %v402
    %1307 = vmatprep.subr.bf16.mxu0 %v399
    %1308 = vmatpush1.bf16.msra.mxu0 %v398
    %1309 = vmatprep.subr.bf16.mxu0 %v395
    %1310 = vmatpush1.bf16.msra.mxu0 %v394
    %1311 = vmatprep.subr.bf16.mxu0 %v391
    %1312 = vmatpush1.bf16.msra.mxu0 %v390
    %1313 = vmatprep.subr.bf16.mxu0 0
    %1314 = vmatpush2.bf16.msra.mxu0 0
    %1315 = vmatprep.subr.bf16.mxu0 0
    %1316 = vmatpush2.bf16.msra.mxu0 0
    %1317 = vmatprep.subr.bf16.mxu0 0
    %1318 = vmatpush2.bf16.msra.mxu0 0
    %1319 = vmatprep.subr.bf16.mxu0 0
    %1320 = vmatpush2.bf16.msra.mxu0 0
    %1321 = vmatprep.subr.bf16.mxu0 0
    %1322 = vmatpush2.bf16.msra.mxu0 0
    %1323 = vmatprep.subr.bf16.mxu0 0
    %1324 = vmatpush2.bf16.msra.mxu0 0
    %1325 = vmatprep.subr.bf16.mxu0 0
    %1326 = vmatpush2.bf16.msra.mxu0 0
    %1327 = vmatprep.subr.bf16.mxu0 0
    %1328 = vmatpush2.bf16.msra.mxu0 0
    %1329 = vmatprep.mubr.bf16.mxu0 0
    %1330 = vmatmul.mubr.bf16.gmra.mxu0 %v1255
    %v1331 = vpop.f32.mrf.mxu0
    %v1332 = vadd.f32 0.0, %v1331
    %v1333 = vpop.f32.mrf.mxu0
    %v1334 = vadd.f32 0.0, %v1333
    %v1335 = vpop.f32.mrf.mxu0
    %v1336 = vpop.f32.mrf.mxu0
    %1337 = vdwg.mxu0
    %v1342 = vcombine.low %v1291, %v1293
    %v1343 = vcombine.low %v1332, %v1334
    %v1345 = vunpack.c.l.s4 1966171168
    %v1346 = vunpack.c.0.s8 %v1345
    %v1347 = vlaneseq
    %v1348 = vshrl.u32 %v1347, 7
    %v1349 = vsub.s32 %v1346, %v1348
    %v1350 = vrot.slane %v1342, %v1349
    %v1352 = vunpack.c.l.s4 1966171168
    %v1353 = vunpack.c.0.s8 %v1352
    %v1354 = vlaneseq
    %v1355 = vshrl.u32 %v1354, 7
    %v1356 = vsub.s32 %v1353, %v1355
    %v1357 = vrot.slane %v1343, %v1356
    %v1358 = vcombine.low %v1350, %v1357
    %v1360 = vunpack.c.l.s4 1966171168
    %v1361 = vunpack.c.0.s8 %v1360
    %v1362 = vlaneseq
    %v1363 = vshrl.u32 %v1362, 7
    %v1364 = vsub.s32 %v1361, %v1363
    %v1365 = vrot.slane %v1358, %v1364
    %v1367 = vadd.f32 %v1254, %v1365
    %v1368 = vmul.f32 %v1367, 0.5
    %v1369 = vtanh.pop %v1368
    %v1370 = vadd.f32 %v1369, 1.0
    %v1371 = vmul.f32 %v1370, 0.5
    %v1373 = vrot.slane %v1367, 3
    %v1375 = vtanh.pop %v1373
    %v1377 = vrot.slane %v1371, 1
    %v1379 = vmul.f32 %v1377, %v1247
    %v1380 = vmul.f32 %v1371, %v1375
    %v1381 = vadd.f32 %v1379, %v1380
    %v1382 = vtanh.pop %v1381
    %v1383 = vrot.slane %v1371, 2
    %v1385 = vmul.f32 %v1383, %v1382
    %1386 = vst [vmem:[#allocation3 + $0x6] sm:$0x1] %v1385
    %s1387 = scalar_lea.vmem [#allocation2], 7
    %v1388 = vld [vmem:[%s1387] ss:$8 sm:$0xf]
    %v1389 = vpack.c.bf16 %v1385, %v1385
    %1390 = vmatprep.subr.bf16.mxu0 %v417
    %1391 = vmatpush1.bf16.msra.mxu0 %v416
    %1392 = vmatprep.subr.bf16.mxu0 %v413
    %1393 = vmatpush1.bf16.msra.mxu0 %v412
    %1394 = vmatprep.subr.bf16.mxu0 %v409
    %1395 = vmatpush1.bf16.msra.mxu0 %v408
    %1396 = vmatprep.subr.bf16.mxu0 %v405
    %1397 = vmatpush1.bf16.msra.mxu0 %v404
    %1398 = vmatprep.subr.bf16.mxu0 %v401
    %1399 = vmatpush1.bf16.msra.mxu0 %v400
    %1400 = vmatprep.subr.bf16.mxu0 %v397
    %1401 = vmatpush1.bf16.msra.mxu0 %v396
    %1402 = vmatprep.subr.bf16.mxu0 %v393
    %1403 = vmatpush1.bf16.msra.mxu0 %v392
    %1404 = vmatprep.subr.bf16.mxu0 %v389
    %1405 = vmatpush1.bf16.msra.mxu0 %v388
    %1406 = vmatprep.subr.bf16.mxu0 0
    %1407 = vmatpush2.bf16.msra.mxu0 0
    %1408 = vmatprep.subr.bf16.mxu0 0
    %1409 = vmatpush2.bf16.msra.mxu0 0
    %1410 = vmatprep.subr.bf16.mxu0 0
    %1411 = vmatpush2.bf16.msra.mxu0 0
    %1412 = vmatprep.subr.bf16.mxu0 0
    %1413 = vmatpush2.bf16.msra.mxu0 0
    %1414 = vmatprep.subr.bf16.mxu0 0
    %1415 = vmatpush2.bf16.msra.mxu0 0
    %1416 = vmatprep.subr.bf16.mxu0 0
    %1417 = vmatpush2.bf16.msra.mxu0 0
    %1418 = vmatprep.subr.bf16.mxu0 0
    %1419 = vmatpush2.bf16.msra.mxu0 0
    %1420 = vmatprep.subr.bf16.mxu0 0
    %1421 = vmatpush2.bf16.msra.mxu0 0
    %1422 = vmatprep.mubr.bf16.mxu0 0
    %1423 = vmatmul.mubr.bf16.gmra.mxu0 %v1389
    %v1424 = vpop.f32.mrf.mxu0
    %v1425 = vadd.f32 0.0, %v1424
    %v1426 = vpop.f32.mrf.mxu0
    %v1427 = vadd.f32 0.0, %v1426
    %v1428 = vpop.f32.mrf.mxu0
    %v1429 = vpop.f32.mrf.mxu0
    %1430 = vdwg.mxu0
    %1431 = vmatprep.subr.bf16.mxu0 %v419
    %1432 = vmatpush1.bf16.msra.mxu0 %v418
    %1433 = vmatprep.subr.bf16.mxu0 %v415
    %1434 = vmatpush1.bf16.msra.mxu0 %v414
    %1435 = vmatprep.subr.bf16.mxu0 %v411
    %1436 = vmatpush1.bf16.msra.mxu0 %v410
    %1437 = vmatprep.subr.bf16.mxu0 %v407
    %1438 = vmatpush1.bf16.msra.mxu0 %v406
    %1439 = vmatprep.subr.bf16.mxu0 %v403
    %1440 = vmatpush1.bf16.msra.mxu0 %v402
    %1441 = vmatprep.subr.bf16.mxu0 %v399
    %1442 = vmatpush1.bf16.msra.mxu0 %v398
    %1443 = vmatprep.subr.bf16.mxu0 %v395
    %1444 = vmatpush1.bf16.msra.mxu0 %v394
    %1445 = vmatprep.subr.bf16.mxu0 %v391
    %1446 = vmatpush1.bf16.msra.mxu0 %v390
    %1447 = vmatprep.subr.bf16.mxu0 0
    %1448 = vmatpush2.bf16.msra.mxu0 0
    %1449 = vmatprep.subr.bf16.mxu0 0
    %1450 = vmatpush2.bf16.msra.mxu0 0
    %1451 = vmatprep.subr.bf16.mxu0 0
    %1452 = vmatpush2.bf16.msra.mxu0 0
    %1453 = vmatprep.subr.bf16.mxu0 0
    %1454 = vmatpush2.bf16.msra.mxu0 0
    %1455 = vmatprep.subr.bf16.mxu0 0
    %1456 = vmatpush2.bf16.msra.mxu0 0
    %1457 = vmatprep.subr.bf16.mxu0 0
    %1458 = vmatpush2.bf16.msra.mxu0 0
    %1459 = vmatprep.subr.bf16.mxu0 0
    %1460 = vmatpush2.bf16.msra.mxu0 0
    %1461 = vmatprep.subr.bf16.mxu0 0
    %1462 = vmatpush2.bf16.msra.mxu0 0
    %1463 = vmatprep.mubr.bf16.mxu0 0
    %1464 = vmatmul.mubr.bf16.gmra.mxu0 %v1389
    %v1465 = vpop.f32.mrf.mxu0
    %v1466 = vadd.f32 0.0, %v1465
    %v1467 = vpop.f32.mrf.mxu0
    %v1468 = vadd.f32 0.0, %v1467
    %v1469 = vpop.f32.mrf.mxu0
    %v1470 = vpop.f32.mrf.mxu0
    %1471 = vdwg.mxu0
    %v1476 = vcombine.low %v1425, %v1427
    %v1477 = vcombine.low %v1466, %v1468
    %v1479 = vunpack.c.l.s4 1966171168
    %v1480 = vunpack.c.0.s8 %v1479
    %v1481 = vlaneseq
    %v1482 = vshrl.u32 %v1481, 7
    %v1483 = vsub.s32 %v1480, %v1482
    %v1484 = vrot.slane %v1476, %v1483
    %v1486 = vunpack.c.l.s4 1966171168
    %v1487 = vunpack.c.0.s8 %v1486
    %v1488 = vlaneseq
    %v1489 = vshrl.u32 %v1488, 7
    %v1490 = vsub.s32 %v1487, %v1489
    %v1491 = vrot.slane %v1477, %v1490
    %v1492 = vcombine.low %v1484, %v1491
    %v1494 = vunpack.c.l.s4 1966171168
    %v1495 = vunpack.c.0.s8 %v1494
    %v1496 = vlaneseq
    %v1497 = vshrl.u32 %v1496, 7
    %v1498 = vsub.s32 %v1495, %v1497
    %v1499 = vrot.slane %v1492, %v1498
    %v1501 = vadd.f32 %v1388, %v1499
    %v1502 = vmul.f32 %v1501, 0.5
    %v1503 = vtanh.pop %v1502
    %v1504 = vadd.f32 %v1503, 1.0
    %v1505 = vmul.f32 %v1504, 0.5
    %v1507 = vrot.slane %v1501, 3
    %v1509 = vtanh.pop %v1507
    %v1511 = vrot.slane %v1505, 1
    %v1513 = vmul.f32 %v1511, %v1381
    %v1514 = vmul.f32 %v1505, %v1509
    %v1515 = vadd.f32 %v1513, %v1514
    %v1516 = vtanh.pop %v1515
    %v1517 = vrot.slane %v1505, 2
    %v1519 = vmul.f32 %v1517, %v1516
    %1520 = vst [vmem:[#allocation3 + $0x7] sm:$0x1] %v1519
    %v1521 = vld [vmem:[#allocation3] sm:$0xff]
    %v1522 = vld [vmem:[#allocation10] sm:$0xff]
    %v1523 = vld [vmem:[#allocation10 + $0x8] sm:$0xff]
    %v1524 = vld [vmem:[#allocation10 + $0x10] sm:$0xff]
    %v1525 = vld [vmem:[#allocation10 + $0x18] sm:$0xff]
    %v1526 = vld [vmem:[#allocation10 + $0x20] sm:$0xff]
    %v1527 = vld [vmem:[#allocation10 + $0x28] sm:$0xff]
    %v1528 = vld [vmem:[#allocation10 + $0x30] sm:$0xff]
    %v1529 = vld [vmem:[#allocation10 + $0x38] sm:$0xff]
    %v1530 = vld [vmem:[#allocation10 + $0x40] sm:$0xff]
    %v1531 = vld [vmem:[#allocation10 + $0x48] sm:$0xff]
    %v1532 = vld [vmem:[#allocation10 + $0x50] sm:$0xff]
    %v1533 = vld [vmem:[#allocation10 + $0x58] sm:$0xff]
    %v1534 = vld [vmem:[#allocation10 + $0x60] sm:$0xff]
    %v1535 = vld [vmem:[#allocation10 + $0x68] sm:$0xff]
    %v1536 = vld [vmem:[#allocation10 + $0x70] sm:$0xff]
    %v1537 = vld [vmem:[#allocation10 + $0x78] sm:$0xff]
    %v1538 = vld [vmem:[%s5] sm:$0x1]
    %v1540 = vlaneseq
    %v1541 = vshrl.u32 %v1540, 7
    %v1542 = vsub.s32 0, %v1541
    %v1543 = vrot.slane %v1538, %v1542
    %1545 = vmatprep.subr.mxu0 0.0
    %1546 = vmatpush1.msra.mxu0 %v1537
    %1547 = vmatprep.subr.mxu0 0.0
    %1548 = vmatpush1.msra.mxu0 %v1536
    %1549 = vmatprep.subr.mxu0 0.0
    %1550 = vmatpush1.msra.mxu0 %v1535
    %1551 = vmatprep.subr.mxu0 0.0
    %1552 = vmatpush1.msra.mxu0 %v1534
    %1553 = vmatprep.subr.mxu0 0.0
    %1554 = vmatpush1.msra.mxu0 %v1533
    %1555 = vmatprep.subr.mxu0 0.0
    %1556 = vmatpush1.msra.mxu0 %v1532
    %1557 = vmatprep.subr.mxu0 0.0
    %1558 = vmatpush1.msra.mxu0 %v1531
    %1559 = vmatprep.subr.mxu0 0.0
    %1560 = vmatpush1.msra.mxu0 %v1530
    %1561 = vmatprep.subr.mxu0 0.0
    %1562 = vmatpush1.msra.mxu0 %v1529
    %1563 = vmatprep.subr.mxu0 0.0
    %1564 = vmatpush1.msra.mxu0 %v1528
    %1565 = vmatprep.subr.mxu0 0.0
    %1566 = vmatpush1.msra.mxu0 %v1527
    %1567 = vmatprep.subr.mxu0 0.0
    %1568 = vmatpush1.msra.mxu0 %v1526
    %1569 = vmatprep.subr.mxu0 0.0
    %1570 = vmatpush1.msra.mxu0 %v1525
    %1571 = vmatprep.subr.mxu0 0.0
    %1572 = vmatpush1.msra.mxu0 %v1524
    %1573 = vmatprep.subr.mxu0 0.0
    %1574 = vmatpush1.msra.mxu0 %v1523
    %1575 = vmatprep.subr.mxu0 0.0
    %1576 = vmatpush1.msra.mxu0 %v1522
    %1577 = vmatprep.subr.mxu0 0.0
    %1578 = vmatpush2.msra.mxu0 0.0
    %1579 = vmatprep.subr.mxu0 0.0
    %1580 = vmatpush2.msra.mxu0 0.0
    %1581 = vmatprep.subr.mxu0 0.0
    %1582 = vmatpush2.msra.mxu0 0.0
    %1583 = vmatprep.subr.mxu0 0.0
    %1584 = vmatpush2.msra.mxu0 0.0
    %1585 = vmatprep.subr.mxu0 0.0
    %1586 = vmatpush2.msra.mxu0 0.0
    %1587 = vmatprep.subr.mxu0 0.0
    %1588 = vmatpush2.msra.mxu0 0.0
    %1589 = vmatprep.subr.mxu0 0.0
    %1590 = vmatpush2.msra.mxu0 0.0
    %1591 = vmatprep.subr.mxu0 0.0
    %1592 = vmatpush2.msra.mxu0 0.0
    %1593 = vmatprep.subr.mxu0 0.0
    %1594 = vmatpush2.msra.mxu0 0.0
    %1595 = vmatprep.subr.mxu0 0.0
    %1596 = vmatpush2.msra.mxu0 0.0
    %1597 = vmatprep.subr.mxu0 0.0
    %1598 = vmatpush2.msra.mxu0 0.0
    %1599 = vmatprep.subr.mxu0 0.0
    %1600 = vmatpush2.msra.mxu0 0.0
    %1601 = vmatprep.subr.mxu0 0.0
    %1602 = vmatpush2.msra.mxu0 0.0
    %1603 = vmatprep.subr.mxu0 0.0
    %1604 = vmatpush2.msra.mxu0 0.0
    %1605 = vmatprep.subr.mxu0 0.0
    %1606 = vmatpush2.msra.mxu0 0.0
    %1607 = vmatprep.subr.mxu0 0.0
    %1608 = vmatpush2.msra.mxu0 0.0
    %1609 = vmatprep.mubr.f32.mxu0 0.0
    %1610 = vmatmul.mubr.f32.gmra.mxu0 %v1521
    %v1611 = vpop.f32.mrf.mxu0
    %v1612 = vadd.f32 %v1543, %v1611
    %v1613 = vpop.f32.mrf.mxu0
    %1614 = vdwg.mxu0
    %1615 = vst [vmem:[#allocation12] sm:$0xff] %v1612
    // Predicated region
    $region42: #{tpu_custom_call.1} parent=1 // pred_check
      _
    $region43: #{tpu_custom_call.1} parent=1 // pred_check_branch
      %1617 = sbr.rel (0) target = $region45
    $region44: #{tpu_custom_call.1} parent=1 // pred_region
      %s1619 = ssub.s32 128, 128
      %1620 = vsyncadd [#allocation6], %s1619
      %s1622 = sshll.u32 [#allocation12], 4
      %s1623 = int_to_ptr.vmem [resolvable:$true] %s1622
      %1625 = dma.vmem_to_hbm [thread:$0]  %s1623, 128, %s6, [#allocation6]
    $region45: #{tpu_custom_call.1} parent=1 // pred_fallthru
      _
    // Predicated region
    $region46: #{tpu_custom_call.1} parent=1 // pred_check
      _
    $region47: #{tpu_custom_call.1} parent=1 // pred_check_branch
      %1627 = sbr.rel (0) target = $region49
    $region48: #{tpu_custom_call.1} parent=1 // pred_region
      %1628 = dma.done [#allocation6], 128
    $region49: #{tpu_custom_call.1} parent=1 // pred_fallthru
      _
    %1629 = vsyncpa [#allocation5], 1
    %1630 = vsyncpa [#allocation8], 1
    %1631 = vsyncpa [#allocation11], 1
    %1632 = vsyncpa [#allocation6], 1

</llo_original>
